<compile_context>
chip_gen: v6e
topology: v6e:2x2x1
jax: 0.10.0
libtpu: 0.0.40
codegen_flags: <defaults>
</compile_context>

<pallas_src>
import functools

import jax
import jax.numpy as jnp
from jax import lax
from jax.experimental import pallas as pl
from jax.experimental.pallas import tpu as pltpu

EPS = 1e-5
_BF16 = jnp.bfloat16


# ----------------------------------------------------------------------------
# In-kernel helpers
# ----------------------------------------------------------------------------
def _write_taps_stride1(slab_ref, src, taps, c, l, pad=3):
    """Scatter src (C, L) into an im2col slab (taps*C, L) for a stride-1 conv.

    Column i of row-block k holds src[:, i + k - pad] (zero where out of
    range), so  W(co, taps*C) @ slab  ==  conv1d(src, W, stride=1, padding=pad).
    Pad strips are rewritten every call (parallel / megacore safe).
    """
    dt = slab_ref.dtype
    for k in range(taps):
        r0, r1 = k * c, (k + 1) * c
        lo, hi = max(0, pad - k), min(l, l + pad - k)
        if lo > 0:
            slab_ref[r0:r1, 0:lo] = jnp.zeros((c, lo), dt)
        if hi < l:
            slab_ref[r0:r1, hi:l] = jnp.zeros((c, l - hi), dt)
        slab_ref[r0:r1, lo:hi] = src[:, lo + k - pad:hi + k - pad].astype(dt)


def _write_bn_partials(sums_ref, h, count):
    """Per-block BatchNorm partials: column 0 = sum, column 1 = centered SSQ."""
    s = jnp.sum(h, axis=1, keepdims=True)                    # (C, 1)
    mu = s * (1.0 / count)
    d = h - mu
    sums_ref[:, 0:1] = s
    sums_ref[:, 1:2] = jnp.sum(d * d, axis=1, keepdims=True)


# ----------------------------------------------------------------------------
# Pass 1 (plain): conv1 (k=7, s=1, p=3) + ReLU + bn1 partial stats
# ----------------------------------------------------------------------------
def _p1_plain_kernel(x_ref, w_ref, h_ref, sums_ref, slab, *, cin, l):
    xv = x_ref[...]                                          # (Cin, L) NCL block
    _write_taps_stride1(slab, xv, 7, cin, l)
    h = jnp.maximum(
        jnp.dot(w_ref[...], slab[...], preferred_element_type=jnp.float32), 0.0)
    h_ref[...] = h                                           # relu(conv1), pre-bn1
    _write_bn_partials(sums_ref, h, l)


# ----------------------------------------------------------------------------
# Pass 1 (downsample): conv1 (k=8, s=2, p=3) + ReLU + conv_down identity
#                      + bn1 partial stats, all from ONE fused matmul.
# ----------------------------------------------------------------------------
def _p1_down_kernel(x_ref, w_ref, hb_ref, sums_ref, slab, *, cin, co, l2):
    # Even/odd lane de-interleave of the stride-2 input (documented strided ds).
    xe = x_ref[:, pl.ds(0, l2, 2)]                           # x[:, 0::2] (Cin, L/2)
    xo = x_ref[:, pl.ds(1, l2, 2)]                           # x[:, 1::2]
    dt = slab.dtype
    for k in range(8):                                       # tap k uses x[:, 2i+k-3]
        r0, r1 = k * cin, (k + 1) * cin
        lo = max(0, (4 - k) // 2)
        hi = min(l2, (2 * l2 + 2 - k) // 2 + 1)
        if lo > 0:
            slab[r0:r1, 0:lo] = jnp.zeros((cin, lo), dt)
        if hi < l2:
            slab[r0:r1, hi:l2] = jnp.zeros((cin, l2 - hi), dt)
        m = (k - 3) // 2
        src = xe if ((k - 3) % 2 == 0) else xo
        slab[r0:r1, lo:hi] = src[:, lo + m:hi + m].astype(dt)
    # (2*Co, 8*Cin) @ (8*Cin, L/2): rows [0,Co) = conv1, rows [Co,2Co) = conv_down.
    hd = jnp.dot(w_ref[...], slab[...], preferred_element_type=jnp.float32)
    h = jnp.maximum(hd[:co, :], 0.0)                         # relu(conv1)
    hb_ref[0, :, :] = h
    hb_ref[1, :, :] = hd[co:, :]                             # identity (no relu/bn)
    _write_bn_partials(sums_ref, h, l2)


# ----------------------------------------------------------------------------
# Pass 2: apply bn1 (global) + conv2 (k=7,s=1,p=3) + identity + ReLU
#         + bn2 partial stats.
# ----------------------------------------------------------------------------
def _p2_kernel(h1_ref, id_ref, ss1_ref, w2_ref, h2_ref, sums_ref, slab, *, co, l):
    h1n = h1_ref[...] * ss1_ref[:, 0:1] + ss1_ref[:, 1:2]    # bn1 (per-channel)
    _write_taps_stride1(slab, h1n, 7, co, l)
    z = jnp.dot(w2_ref[...], slab[...], preferred_element_type=jnp.float32)
    h2 = jnp.maximum(z + id_ref[...], 0.0)                   # conv2 + identity + relu
    h2_ref[...] = h2                                         # pre-bn2
    _write_bn_partials(sums_ref, h2, l)


# ----------------------------------------------------------------------------
# Pass 3: apply bn2 (global batch stats); output already NCL / lane-dense in L.
# ----------------------------------------------------------------------------
def _p3_kernel(h2_ref, ss2_ref, out_ref):
    out_ref[...] = h2_ref[...] * ss2_ref[:, 0:1] + ss2_ref[:, 1:2]


# ----------------------------------------------------------------------------
# Wrapper helpers
# ----------------------------------------------------------------------------
def _bn_scale_shift(sums, gamma, beta, count_per_block):
    """Combine per-block (sum, centered SSQ) -> fused BN scale/shift (Co, 2).

    Chan's parallel-variance combination avoids the E[x^2]-E[x]^2 cancellation.
    Biased batch variance, eps=1e-5 (training-mode BatchNorm1d).
    """
    s_b, ss_b = sums[:, :, 0], sums[:, :, 1]                 # (blocks, Co)
    total = sums.shape[0] * count_per_block
    mean = jnp.sum(s_b, axis=0) / total
    mean_b = s_b / count_per_block
    m2 = jnp.sum(ss_b, axis=0) + count_per_block * jnp.sum(
        (mean_b - mean) ** 2, axis=0)
    var = jnp.maximum(m2 / total, 0.0)
    scale = gamma * lax.rsqrt(var + EPS)
    shift = beta - mean * scale
    return jnp.stack([scale, shift], axis=1)                 # (Co, 2) f32


def _compiler_params():
    # Generation-aware VMEM limit: ~75% of physical (headroom for Mosaic
    # internal scratch), capped at 100 MiB so v5e/v6e (128 MiB) get large
    # buffers while v7x (64 MiB) is asked for only ~48 MiB.
    try:
        cap = int(pltpu.get_tpu_info().vmem_capacity_bytes)
    except Exception:  # noqa: BLE001 - fall back to a conservative default
        cap = 64 * 2**20
    limit = int(min(100 * 2**20, max(32 * 2**20, (cap * 3) // 4)))
    return pltpu.CompilerParams(dimension_semantics=("parallel",),
                                vmem_limit_bytes=limit)


# ----------------------------------------------------------------------------
# Forward wrapper: 3 gridded pallas_calls, tiny stat-combines in between.
# ----------------------------------------------------------------------------
@functools.partial(jax.jit, static_argnames=("downsample",))
def resblock_forward(x_ncl, params, downsample):
    x = x_ncl.astype(jnp.float32)                            # (N, Cin, L), NCL
    n, cin, l = x.shape

    w1 = params["conv1"].astype(jnp.float32)                 # (Co, Cin, K)
    co, _, k1 = w1.shape
    # Conv weights as (Co, K*Cin) matrices; column order (k, ci) matches the slab.
    w2m = jnp.transpose(params["conv2"].astype(jnp.float32),
                        (0, 2, 1)).reshape(co, 7 * co).astype(_BF16)
    g1 = params["bn1_gamma"].astype(jnp.float32)
    b1 = params["bn1_beta"].astype(jnp.float32)
    g2 = params["bn2_gamma"].astype(jnp.float32)
    b2 = params["bn2_beta"].astype(jnp.float32)

    cparams = _compiler_params()
    f32 = jnp.float32

    if not downsample:
        assert cin == co and k1 == 7, "plain ResBlock requires cin == co, k=7"
        l_out = l
        w1m = jnp.transpose(w1, (0, 2, 1)).reshape(co, 7 * cin).astype(_BF16)
        h1buf, sums1 = pl.pallas_call(
            functools.partial(_p1_plain_kernel, cin=cin, l=l),
            grid=(n,),
            in_specs=[pl.BlockSpec((None, cin, l), lambda i: (i, 0, 0)),
                      pl.BlockSpec((co, 7 * cin), lambda i: (0, 0))],
            out_specs=(pl.BlockSpec((None, co, l), lambda i: (i, 0, 0)),
                       pl.BlockSpec((None, co, 2), lambda i: (i, 0, 0))),
            out_shape=(jax.ShapeDtypeStruct((n, co, l), f32),
                       jax.ShapeDtypeStruct((n, co, 2), f32)),
            scratch_shapes=[pltpu.VMEM((7 * cin, l), _BF16)],
            compiler_params=cparams,
            cost_estimate=pl.CostEstimate(
                flops=2 * n * l * 7 * cin * co, transcendentals=0,
                bytes_accessed=4 * (x.size + n * co * l) + 2 * co * 7 * cin),
        )(x, w1m)
        h1_arr, id_arr = h1buf, x
        h1_spec = pl.BlockSpec((None, co, l_out), lambda i: (i, 0, 0))
        id_spec = pl.BlockSpec((None, cin, l), lambda i: (i, 0, 0))
    else:
        assert k1 == 8 and l % 2 == 0, "downsample path requires k=8, even L"
        l_out = l // 2
        wd = params["conv_down"].astype(jnp.float32)         # (Co, Cin, 2)
        # conv_down folded into conv1: its taps hit x[2i] (k=3) and x[2i+1] (k=4).
        w1m = jnp.transpose(w1, (0, 2, 1)).reshape(co, 8 * cin)
        wd_emb = jnp.zeros((co, 8 * cin), f32)
        wd_emb = wd_emb.at[:, 3 * cin:4 * cin].set(wd[:, :, 0])
        wd_emb = wd_emb.at[:, 4 * cin:5 * cin].set(wd[:, :, 1])
        w1d = jnp.concatenate([w1m, wd_emb], axis=0).astype(_BF16)  # (2Co, 8Cin)

        hbuf, sums1 = pl.pallas_call(
            functools.partial(_p1_down_kernel, cin=cin, co=co, l2=l_out),
            grid=(n,),
            in_specs=[pl.BlockSpec((None, cin, l), lambda i: (i, 0, 0)),
                      pl.BlockSpec((2 * co, 8 * cin), lambda i: (0, 0))],
            out_specs=(pl.BlockSpec((None, 2, co, l_out), lambda i: (i, 0, 0, 0)),
                       pl.BlockSpec((None, co, 2), lambda i: (i, 0, 0))),
            out_shape=(jax.ShapeDtypeStruct((n, 2, co, l_out), f32),
                       jax.ShapeDtypeStruct((n, co, 2), f32)),
            scratch_shapes=[pltpu.VMEM((8 * cin, l_out), _BF16)],
            compiler_params=cparams,
            cost_estimate=pl.CostEstimate(
                flops=2 * n * l_out * 8 * cin * 2 * co, transcendentals=0,
                bytes_accessed=4 * (x.size + n * 2 * co * l_out)
                + 2 * 2 * co * 8 * cin),
        )(x, w1d)
        h1_arr, id_arr = hbuf, hbuf                          # channel-block 0 / 1
        h1_spec = pl.BlockSpec((None, None, co, l_out), lambda i: (i, 0, 0, 0))
        id_spec = pl.BlockSpec((None, None, co, l_out), lambda i: (i, 1, 0, 0))

    ss1 = _bn_scale_shift(sums1, g1, b1, l_out)              # (Co, 2) fused bn1

    h2buf, sums2 = pl.pallas_call(
        functools.partial(_p2_kernel, co=co, l=l_out),
        grid=(n,),
        in_specs=[h1_spec, id_spec,
                  pl.BlockSpec((co, 2), lambda i: (0, 0)),
                  pl.BlockSpec((co, 7 * co), lambda i: (0, 0))],
        out_specs=(pl.BlockSpec((None, co, l_out), lambda i: (i, 0, 0)),
                   pl.BlockSpec((None, co, 2), lambda i: (i, 0, 0))),
        out_shape=(jax.ShapeDtypeStruct((n, co, l_out), f32),
                   jax.ShapeDtypeStruct((n, co, 2), f32)),
        scratch_shapes=[pltpu.VMEM((7 * co, l_out), _BF16)],
        compiler_params=cparams,
        cost_estimate=pl.CostEstimate(
            flops=2 * n * l_out * 7 * co * co, transcendentals=0,
            bytes_accessed=4 * 3 * n * co * l_out + 2 * co * 7 * co),
    )(h1_arr, id_arr, ss1, w2m)

    ss2 = _bn_scale_shift(sums2, g2, b2, l_out)              # (Co, 2) fused bn2

    out = pl.pallas_call(
        _p3_kernel,
        grid=(n,),
        in_specs=[pl.BlockSpec((None, co, l_out), lambda i: (i, 0, 0)),
                  pl.BlockSpec((co, 2), lambda i: (0, 0))],
        out_specs=pl.BlockSpec((None, co, l_out), lambda i: (i, 0, 0)),
        out_shape=jax.ShapeDtypeStruct((n, co, l_out), f32),
        compiler_params=cparams,
        cost_estimate=pl.CostEstimate(
            flops=2 * n * co * l_out, transcendentals=0,
            bytes_accessed=4 * 2 * n * co * l_out),
    )(h2buf, ss2)

    return out                                               # (N, Co, L_out), NCL


# ----------------------------------------------------------------------------
# Pure-JAX reference (matches PyTorch forward, BN in training mode).
# ----------------------------------------------------------------------------
def ref_resblock(x, p, downsample):
    def conv1d(y, w, stride, pad):
        return lax.conv_general_dilated(
            y, w, window_strides=(stride,), padding=[(pad, pad)],
            dimension_numbers=("NCH", "OIH", "NCH"))

    def bn(y, g, b):
        mean = jnp.mean(y, axis=(0, 2), keepdims=True)
        var = jnp.mean(jnp.square(y - mean), axis=(0, 2), keepdims=True)
        return (y - mean) / jnp.sqrt(var + EPS) * g.reshape(1, -1, 1) \
            + b.reshape(1, -1, 1)

    out = conv1d(x, p["conv1"], 2 if downsample else 1, 3)
    out = jnp.maximum(out, 0.0)
    out = bn(out, p["bn1_gamma"], p["bn1_beta"])
    out = conv1d(out, p["conv2"], 1, 3)
    identity = conv1d(x, p["conv_down"], 2, 0) if downsample else x
    out = jnp.maximum(out + identity, 0.0)
    out = bn(out, p["bn2_gamma"], p["bn2_beta"])
    return out


def init_params(key, cin, co, downsample):
    k1 = 8 if downsample else 7
    ks = jax.random.split(key, 7)
    return {
        "conv1": 0.2 * jax.random.normal(ks[0], (co, cin, k1), jnp.float32),
        "conv2": 0.2 * jax.random.normal(ks[1], (co, co, 7), jnp.float32),
        "conv_down": 0.2 * jax.random.normal(ks[2], (co, cin, 2), jnp.float32),
        "bn1_gamma": 1.0 + 0.1 * jax.random.normal(ks[3], (co,), jnp.float32),
        "bn1_beta": 0.1 * jax.random.normal(ks[4], (co,), jnp.float32),
        "bn2_gamma": 1.0 + 0.1 * jax.random.normal(ks[5], (co,), jnp.float32),
        "bn2_beta": 0.1 * jax.random.normal(ks[6], (co,), jnp.float32),
    }


if __name__ == "__main__":
    key = jax.random.PRNGKey(0)
    kx1, kp1, kx2, kp2 = jax.random.split(key, 4)

    # Case 1: no downsample (residual requires cin == co).
    n, cin, l = 2, 8, 16
    x1 = jax.random.normal(kx1, (n, cin, l), jnp.float32)
    p1 = init_params(kp1, cin, cin, downsample=False)
    out1 = jax.block_until_ready(resblock_forward(x1, p1, downsample=False))
    ref1 = ref_resblock(x1, p1, downsample=False)
    assert out1.shape == (n, cin, l)
    # bf16 MXU operands (f32 accumulate) => expect ~1e-2 level deviation vs f32.
    assert bool(jnp.allclose(out1, ref1, rtol=5e-2, atol=5e-2)), (
        float(jnp.max(jnp.abs(out1 - ref1))))

    # Case 2: downsample=True (cin=8 -> co=16, length 16 -> 8).
    cin2, co2 = 8, 16
    x2 = jax.random.normal(kx2, (n, cin2, l), jnp.float32)
    p2 = init_params(kp2, cin2, co2, downsample=True)
    out2 = jax.block_until_ready(resblock_forward(x2, p2, downsample=True))
    ref2 = ref_resblock(x2, p2, downsample=True)
    assert out2.shape == (n, co2, l // 2)
    assert bool(jnp.allclose(out2, ref2, rtol=5e-2, atol=5e-2)), (
        float(jnp.max(jnp.abs(out2 - ref2))))

    print("KERNEL_OK")
</pallas_src>

<mosaic_0001>
module attributes {stable_mosaic.version = 11 : i64} {
  func.func @_p1_plain_kernel(%arg0: i32, %arg1: memref<1x8x16xf32, #tpu.memory_space<vmem>>, %arg2: memref<8x56xbf16, #tpu.memory_space<vmem>>, %arg3: memref<1x8x16xf32, #tpu.memory_space<vmem>>, %arg4: memref<1x8x2xf32, #tpu.memory_space<vmem>>, %arg5: memref<56x16xbf16, #tpu.memory_space<vmem>>) attributes {dimension_semantics = [#tpu.dimension_semantics<parallel>], iteration_bounds = array<i64: 2>, scalar_prefetch = 0 : i64, scratch_operands = 1 : i64, tpu.core_type = #tpu.core_type<tc>, window_params = [{transform_indices = @transform_0, window_bounds = array<i64: 1, 8, 16>}, {pipeline_mode = #tpu.pipeline_mode<synchronous>, transform_indices = @transform_1, window_bounds = array<i64: 8, 56>}, {transform_indices = @transform_2, window_bounds = array<i64: 1, 8, 16>}, {transform_indices = @transform_3, window_bounds = array<i64: 1, 8, 2>}]} {
    %c0 = arith.constant 0 : index
    %c0_0 = arith.constant 0 : index
    %c0_1 = arith.constant 0 : index
    %0 = vector.load %arg1[%c0, %c0_0, %c0_1] : memref<1x8x16xf32, #tpu.memory_space<vmem>>, vector<1x8x16xf32>
    %1 = vector.shape_cast %0 : vector<1x8x16xf32> to vector<8x16xf32>
    %cst = arith.constant 0.000000e+00 : bf16
    %2 = vector.broadcast %cst : bf16 to vector<8x3xbf16>
    %c0_2 = arith.constant 0 : index
    %c0_3 = arith.constant 0 : index
    %3 = vector.load %arg5[%c0_2, %c0_3] : memref<56x16xbf16, #tpu.memory_space<vmem>>, vector<8x3xbf16>
    tpu.vector_store %arg5[%c0_2, %c0_3], %2 {strides = array<i32>} : memref<56x16xbf16, #tpu.memory_space<vmem>>, vector<8x3xbf16>,
    %4 = vector.extract_strided_slice %1 {offsets = [0, 0], sizes = [8, 13], strides = [1, 1]} : vector<8x16xf32> to vector<8x13xf32>
    %5 = arith.truncf %4 : vector<8x13xf32> to vector<8x13xbf16>
    %c0_4 = arith.constant 0 : index
    %c3 = arith.constant 3 : index
    %6 = vector.load %arg5[%c0_4, %c3] : memref<56x16xbf16, #tpu.memory_space<vmem>>, vector<8x13xbf16>
    tpu.vector_store %arg5[%c0_4, %c3], %5 {strides = array<i32>} : memref<56x16xbf16, #tpu.memory_space<vmem>>, vector<8x13xbf16>,
    %cst_5 = arith.constant 0.000000e+00 : bf16
    %7 = vector.broadcast %cst_5 : bf16 to vector<8x2xbf16>
    %c8 = arith.constant 8 : index
    %c0_6 = arith.constant 0 : index
    %8 = vector.load %arg5[%c8, %c0_6] : memref<56x16xbf16, #tpu.memory_space<vmem>>, vector<8x2xbf16>
    tpu.vector_store %arg5[%c8, %c0_6], %7 {strides = array<i32>} : memref<56x16xbf16, #tpu.memory_space<vmem>>, vector<8x2xbf16>,
    %9 = vector.extract_strided_slice %1 {offsets = [0, 0], sizes = [8, 14], strides = [1, 1]} : vector<8x16xf32> to vector<8x14xf32>
    %10 = arith.truncf %9 : vector<8x14xf32> to vector<8x14xbf16>
    %c8_7 = arith.constant 8 : index
    %c2 = arith.constant 2 : index
    %11 = vector.load %arg5[%c8_7, %c2] : memref<56x16xbf16, #tpu.memory_space<vmem>>, vector<8x14xbf16>
    tpu.vector_store %arg5[%c8_7, %c2], %10 {strides = array<i32>} : memref<56x16xbf16, #tpu.memory_space<vmem>>, vector<8x14xbf16>,
    %cst_8 = arith.constant 0.000000e+00 : bf16
    %12 = vector.broadcast %cst_8 : bf16 to vector<8x1xbf16>
    %c16 = arith.constant 16 : index
    %c0_9 = arith.constant 0 : index
    %13 = vector.load %arg5[%c16, %c0_9] : memref<56x16xbf16, #tpu.memory_space<vmem>>, vector<8x1xbf16>
    tpu.vector_store %arg5[%c16, %c0_9], %12 {strides = array<i32>} : memref<56x16xbf16, #tpu.memory_space<vmem>>, vector<8x1xbf16>,
    %14 = vector.extract_strided_slice %1 {offsets = [0, 0], sizes = [8, 15], strides = [1, 1]} : vector<8x16xf32> to vector<8x15xf32>
    %15 = arith.truncf %14 : vector<8x15xf32> to vector<8x15xbf16>
    %c16_10 = arith.constant 16 : index
    %c1 = arith.constant 1 : index
    %16 = vector.load %arg5[%c16_10, %c1] : memref<56x16xbf16, #tpu.memory_space<vmem>>, vector<8x15xbf16>
    tpu.vector_store %arg5[%c16_10, %c1], %15 {strides = array<i32>} : memref<56x16xbf16, #tpu.memory_space<vmem>>, vector<8x15xbf16>,
    %17 = arith.truncf %1 : vector<8x16xf32> to vector<8x16xbf16>
    %c24 = arith.constant 24 : index
    %c0_11 = arith.constant 0 : index
    %18 = vector.load %arg5[%c24, %c0_11] : memref<56x16xbf16, #tpu.memory_space<vmem>>, vector<8x16xbf16>
    tpu.vector_store %arg5[%c24, %c0_11], %17 {strides = array<i32>} : memref<56x16xbf16, #tpu.memory_space<vmem>>, vector<8x16xbf16>,
    %cst_12 = arith.constant 0.000000e+00 : bf16
    %19 = vector.broadcast %cst_12 : bf16 to vector<8x1xbf16>
    %c32 = arith.constant 32 : index
    %c15 = arith.constant 15 : index
    %20 = vector.load %arg5[%c32, %c15] : memref<56x16xbf16, #tpu.memory_space<vmem>>, vector<8x1xbf16>
    tpu.vector_store %arg5[%c32, %c15], %19 {strides = array<i32>} : memref<56x16xbf16, #tpu.memory_space<vmem>>, vector<8x1xbf16>,
    %21 = vector.extract_strided_slice %1 {offsets = [0, 1], sizes = [8, 15], strides = [1, 1]} : vector<8x16xf32> to vector<8x15xf32>
    %22 = arith.truncf %21 : vector<8x15xf32> to vector<8x15xbf16>
    %c32_13 = arith.constant 32 : index
    %c0_14 = arith.constant 0 : index
    %23 = vector.load %arg5[%c32_13, %c0_14] : memref<56x16xbf16, #tpu.memory_space<vmem>>, vector<8x15xbf16>
    tpu.vector_store %arg5[%c32_13, %c0_14], %22 {strides = array<i32>} : memref<56x16xbf16, #tpu.memory_space<vmem>>, vector<8x15xbf16>,
    %cst_15 = arith.constant 0.000000e+00 : bf16
    %24 = vector.broadcast %cst_15 : bf16 to vector<8x2xbf16>
    %c40 = arith.constant 40 : index
    %c14 = arith.constant 14 : index
    %25 = vector.load %arg5[%c40, %c14] : memref<56x16xbf16, #tpu.memory_space<vmem>>, vector<8x2xbf16>
    tpu.vector_store %arg5[%c40, %c14], %24 {strides = array<i32>} : memref<56x16xbf16, #tpu.memory_space<vmem>>, vector<8x2xbf16>,
    %26 = vector.extract_strided_slice %1 {offsets = [0, 2], sizes = [8, 14], strides = [1, 1]} : vector<8x16xf32> to vector<8x14xf32>
    %27 = arith.truncf %26 : vector<8x14xf32> to vector<8x14xbf16>
    %c40_16 = arith.constant 40 : index
    %c0_17 = arith.constant 0 : index
    %28 = vector.load %arg5[%c40_16, %c0_17] : memref<56x16xbf16, #tpu.memory_space<vmem>>, vector<8x14xbf16>
    tpu.vector_store %arg5[%c40_16, %c0_17], %27 {strides = array<i32>} : memref<56x16xbf16, #tpu.memory_space<vmem>>, vector<8x14xbf16>,
    %cst_18 = arith.constant 0.000000e+00 : bf16
    %29 = vector.broadcast %cst_18 : bf16 to vector<8x3xbf16>
    %c48 = arith.constant 48 : index
    %c13 = arith.constant 13 : index
    %30 = vector.load %arg5[%c48, %c13] : memref<56x16xbf16, #tpu.memory_space<vmem>>, vector<8x3xbf16>
    tpu.vector_store %arg5[%c48, %c13], %29 {strides = array<i32>} : memref<56x16xbf16, #tpu.memory_space<vmem>>, vector<8x3xbf16>,
    %31 = vector.extract_strided_slice %1 {offsets = [0, 3], sizes = [8, 13], strides = [1, 1]} : vector<8x16xf32> to vector<8x13xf32>
    %32 = arith.truncf %31 : vector<8x13xf32> to vector<8x13xbf16>
    %c48_19 = arith.constant 48 : index
    %c0_20 = arith.constant 0 : index
    %33 = vector.load %arg5[%c48_19, %c0_20] : memref<56x16xbf16, #tpu.memory_space<vmem>>, vector<8x13xbf16>
    tpu.vector_store %arg5[%c48_19, %c0_20], %32 {strides = array<i32>} : memref<56x16xbf16, #tpu.memory_space<vmem>>, vector<8x13xbf16>,
    %c0_21 = arith.constant 0 : index
    %c0_22 = arith.constant 0 : index
    %34 = vector.load %arg2[%c0_21, %c0_22] : memref<8x56xbf16, #tpu.memory_space<vmem>>, vector<8x56xbf16>
    %c0_23 = arith.constant 0 : index
    %c0_24 = arith.constant 0 : index
    %35 = vector.load %arg5[%c0_23, %c0_24] : memref<56x16xbf16, #tpu.memory_space<vmem>>, vector<56x16xbf16>
    %cst_25 = arith.constant dense<0.000000e+00> : vector<8x16xf32>
    %36 = tpu.matmul %34, %35, %cst_25 {dimension_numbers = #tpu.dot_dimension_numbers<[1], [0], [0], [1], [0, 0, 1, 1], [], []>} : vector<8x56xbf16>, vector<56x16xbf16>, vector<8x16xf32> -> vector<8x16xf32>
    %cst_26 = arith.constant 0.000000e+00 : f32
    %37 = vector.broadcast %cst_26 : f32 to vector<8x16xf32>
    %38 = arith.maximumf %36, %37 : vector<8x16xf32>
    %c0_27 = arith.constant 0 : index
    %c0_28 = arith.constant 0 : index
    %c0_29 = arith.constant 0 : index
    %39 = vector.load %arg3[%c0_27, %c0_28, %c0_29] : memref<1x8x16xf32, #tpu.memory_space<vmem>>, vector<1x8x16xf32>
    %40 = vector.shape_cast %39 : vector<1x8x16xf32> to vector<8x16xf32>
    %41 = vector.shape_cast %38 : vector<8x16xf32> to vector<1x8x16xf32>
    tpu.vector_store %arg3[%c0_27, %c0_28, %c0_29], %41 {strides = array<i32>} : memref<1x8x16xf32, #tpu.memory_space<vmem>>, vector<1x8x16xf32>,
    %cst_30 = arith.constant dense<0.000000e+00> : vector<8xf32>
    %42 = vector.multi_reduction <add>, %38, %cst_30 [1] : vector<8x16xf32> to vector<8xf32>
    %43 = vector.shape_cast %42 : vector<8xf32> to vector<8x1xf32>
    %cst_31 = arith.constant 6.250000e-02 : f32
    %44 = vector.broadcast %cst_31 : f32 to vector<8x1xf32>
    %45 = arith.mulf %43, %44 : vector<8x1xf32>
    %46 = vector.broadcast %45 : vector<8x1xf32> to vector<8x16xf32>
    %47 = arith.subf %38, %46 : vector<8x16xf32>
    %c0_32 = arith.constant 0 : index
    %c0_33 = arith.constant 0 : index
    %c0_34 = arith.constant 0 : index
    %48 = vector.load %arg4[%c0_32, %c0_33, %c0_34] : memref<1x8x2xf32, #tpu.memory_space<vmem>>, vector<1x8x1xf32>
    %49 = vector.shape_cast %48 : vector<1x8x1xf32> to vector<8x1xf32>
    %50 = vector.shape_cast %43 : vector<8x1xf32> to vector<1x8x1xf32>
    tpu.vector_store %arg4[%c0_32, %c0_33, %c0_34], %50 {strides = array<i32>} : memref<1x8x2xf32, #tpu.memory_space<vmem>>, vector<1x8x1xf32>,
    %51 = arith.mulf %47, %47 : vector<8x16xf32>
    %cst_35 = arith.constant dense<0.000000e+00> : vector<8xf32>
    %52 = vector.multi_reduction <add>, %51, %cst_35 [1] : vector<8x16xf32> to vector<8xf32>
    %53 = vector.shape_cast %52 : vector<8xf32> to vector<8x1xf32>
    %c0_36 = arith.constant 0 : index
    %c0_37 = arith.constant 0 : index
    %c1_38 = arith.constant 1 : index
    %54 = vector.load %arg4[%c0_36, %c0_37, %c1_38] : memref<1x8x2xf32, #tpu.memory_space<vmem>>, vector<1x8x1xf32>
    %55 = vector.shape_cast %54 : vector<1x8x1xf32> to vector<8x1xf32>
    %56 = vector.shape_cast %53 : vector<8x1xf32> to vector<1x8x1xf32>
    tpu.vector_store %arg4[%c0_36, %c0_37, %c1_38], %56 {strides = array<i32>} : memref<1x8x2xf32, #tpu.memory_space<vmem>>, vector<1x8x1xf32>,
    return
  }
  func.func @transform_0(%arg0: i32) -> (i32, i32, i32) {
    %c0_i32 = arith.constant 0 : i32
    %c0_i32_0 = arith.constant 0 : i32
    %c0_i32_1 = arith.constant 0 : i32
    return %arg0, %c0_i32, %c0_i32_0 : i32, i32, i32
  }
  func.func @transform_1(%arg0: i32) -> (i32, i32) {
    %c0_i32 = arith.constant 0 : i32
    %c0_i32_0 = arith.constant 0 : i32
    %c0_i32_1 = arith.constant 0 : i32
    return %c0_i32, %c0_i32_0 : i32, i32
  }
  func.func @transform_2(%arg0: i32) -> (i32, i32, i32) {
    %c0_i32 = arith.constant 0 : i32
    %c0_i32_0 = arith.constant 0 : i32
    %c0_i32_1 = arith.constant 0 : i32
    return %arg0, %c0_i32, %c0_i32_0 : i32, i32, i32
  }
  func.func @transform_3(%arg0: i32) -> (i32, i32, i32) {
    %c0_i32 = arith.constant 0 : i32
    %c0_i32_0 = arith.constant 0 : i32
    %c0_i32_1 = arith.constant 0 : i32
    return %arg0, %c0_i32, %c0_i32_0 : i32, i32, i32
  }
}

module attributes {stable_mosaic.version = 11 : i64} {
  func.func @_p3_kernel(%arg0: i32, %arg1: memref<1x8x16xf32, #tpu.memory_space<vmem>>, %arg2: memref<8x2xf32, #tpu.memory_space<vmem>>, %arg3: memref<1x8x16xf32, #tpu.memory_space<vmem>>) attributes {dimension_semantics = [#tpu.dimension_semantics<parallel>], iteration_bounds = array<i64: 2>, scalar_prefetch = 0 : i64, scratch_operands = 0 : i64, tpu.core_type = #tpu.core_type<tc>, window_params = [{transform_indices = @transform_0, window_bounds = array<i64: 1, 8, 16>}, {pipeline_mode = #tpu.pipeline_mode<synchronous>, transform_indices = @transform_1, window_bounds = array<i64: 8, 2>}, {transform_indices = @transform_2, window_bounds = array<i64: 1, 8, 16>}]} {
    %c0 = arith.constant 0 : index
    %c0_0 = arith.constant 0 : index
    %c0_1 = arith.constant 0 : index
    %0 = vector.load %arg1[%c0, %c0_0, %c0_1] : memref<1x8x16xf32, #tpu.memory_space<vmem>>, vector<1x8x16xf32>
    %1 = vector.shape_cast %0 : vector<1x8x16xf32> to vector<8x16xf32>
    %c0_2 = arith.constant 0 : index
    %c0_3 = arith.constant 0 : index
    %2 = vector.load %arg2[%c0_2, %c0_3] : memref<8x2xf32, #tpu.memory_space<vmem>>, vector<8x1xf32>
    %3 = vector.broadcast %2 : vector<8x1xf32> to vector<8x16xf32>
    %4 = arith.mulf %1, %3 : vector<8x16xf32>
    %c0_4 = arith.constant 0 : index
    %c1 = arith.constant 1 : index
    %5 = vector.load %arg2[%c0_4, %c1] : memref<8x2xf32, #tpu.memory_space<vmem>>, vector<8x1xf32>
    %6 = vector.broadcast %5 : vector<8x1xf32> to vector<8x16xf32>
    %7 = arith.addf %4, %6 : vector<8x16xf32>
    %c0_5 = arith.constant 0 : index
    %c0_6 = arith.constant 0 : index
    %c0_7 = arith.constant 0 : index
    %8 = vector.load %arg3[%c0_5, %c0_6, %c0_7] : memref<1x8x16xf32, #tpu.memory_space<vmem>>, vector<1x8x16xf32>
    %9 = vector.shape_cast %8 : vector<1x8x16xf32> to vector<8x16xf32>
    %10 = vector.shape_cast %7 : vector<8x16xf32> to vector<1x8x16xf32>
    tpu.vector_store %arg3[%c0_5, %c0_6, %c0_7], %10 {strides = array<i32>} : memref<1x8x16xf32, #tpu.memory_space<vmem>>, vector<1x8x16xf32>,
    return
  }
  func.func @transform_0(%arg0: i32) -> (i32, i32, i32) {
    %c0_i32 = arith.constant 0 : i32
    %c0_i32_0 = arith.constant 0 : i32
    %c0_i32_1 = arith.constant 0 : i32
    return %arg0, %c0_i32, %c0_i32_0 : i32, i32, i32
  }
  func.func @transform_1(%arg0: i32) -> (i32, i32) {
    %c0_i32 = arith.constant 0 : i32
    %c0_i32_0 = arith.constant 0 : i32
    %c0_i32_1 = arith.constant 0 : i32
    return %c0_i32, %c0_i32_0 : i32, i32
  }
  func.func @transform_2(%arg0: i32) -> (i32, i32, i32) {
    %c0_i32 = arith.constant 0 : i32
    %c0_i32_0 = arith.constant 0 : i32
    %c0_i32_1 = arith.constant 0 : i32
    return %arg0, %c0_i32, %c0_i32_0 : i32, i32, i32
  }
}

module attributes {stable_mosaic.version = 11 : i64} {
  func.func @_p2_kernel(%arg0: i32, %arg1: memref<1x8x16xf32, #tpu.memory_space<vmem>>, %arg2: memref<1x8x16xf32, #tpu.memory_space<vmem>>, %arg3: memref<8x2xf32, #tpu.memory_space<vmem>>, %arg4: memref<8x56xbf16, #tpu.memory_space<vmem>>, %arg5: memref<1x8x16xf32, #tpu.memory_space<vmem>>, %arg6: memref<1x8x2xf32, #tpu.memory_space<vmem>>, %arg7: memref<56x16xbf16, #tpu.memory_space<vmem>>) attributes {dimension_semantics = [#tpu.dimension_semantics<parallel>], iteration_bounds = array<i64: 2>, scalar_prefetch = 0 : i64, scratch_operands = 1 : i64, tpu.core_type = #tpu.core_type<tc>, window_params = [{transform_indices = @transform_0, window_bounds = array<i64: 1, 8, 16>}, {transform_indices = @transform_1, window_bounds = array<i64: 1, 8, 16>}, {pipeline_mode = #tpu.pipeline_mode<synchronous>, transform_indices = @transform_2, window_bounds = array<i64: 8, 2>}, {pipeline_mode = #tpu.pipeline_mode<synchronous>, transform_indices = @transform_3, window_bounds = array<i64: 8, 56>}, {transform_indices = @transform_4, window_bounds = array<i64: 1, 8, 16>}, {transform_indices = @transform_5, window_bounds = array<i64: 1, 8, 2>}]} {
    %c0 = arith.constant 0 : index
    %c0_0 = arith.constant 0 : index
    %c0_1 = arith.constant 0 : index
    %0 = vector.load %arg1[%c0, %c0_0, %c0_1] : memref<1x8x16xf32, #tpu.memory_space<vmem>>, vector<1x8x16xf32>
    %1 = vector.shape_cast %0 : vector<1x8x16xf32> to vector<8x16xf32>
    %c0_2 = arith.constant 0 : index
    %c0_3 = arith.constant 0 : index
    %2 = vector.load %arg3[%c0_2, %c0_3] : memref<8x2xf32, #tpu.memory_space<vmem>>, vector<8x1xf32>
    %3 = vector.broadcast %2 : vector<8x1xf32> to vector<8x16xf32>
    %4 = arith.mulf %1, %3 : vector<8x16xf32>
    %c0_4 = arith.constant 0 : index
    %c1 = arith.constant 1 : index
    %5 = vector.load %arg3[%c0_4, %c1] : memref<8x2xf32, #tpu.memory_space<vmem>>, vector<8x1xf32>
    %6 = vector.broadcast %5 : vector<8x1xf32> to vector<8x16xf32>
    %7 = arith.addf %4, %6 : vector<8x16xf32>
    %cst = arith.constant 0.000000e+00 : bf16
    %8 = vector.broadcast %cst : bf16 to vector<8x3xbf16>
    %c0_5 = arith.constant 0 : index
    %c0_6 = arith.constant 0 : index
    %9 = vector.load %arg7[%c0_5, %c0_6] : memref<56x16xbf16, #tpu.memory_space<vmem>>, vector<8x3xbf16>
    tpu.vector_store %arg7[%c0_5, %c0_6], %8 {strides = array<i32>} : memref<56x16xbf16, #tpu.memory_space<vmem>>, vector<8x3xbf16>,
    %10 = vector.extract_strided_slice %7 {offsets = [0, 0], sizes = [8, 13], strides = [1, 1]} : vector<8x16xf32> to vector<8x13xf32>
    %11 = arith.truncf %10 : vector<8x13xf32> to vector<8x13xbf16>
    %c0_7 = arith.constant 0 : index
    %c3 = arith.constant 3 : index
    %12 = vector.load %arg7[%c0_7, %c3] : memref<56x16xbf16, #tpu.memory_space<vmem>>, vector<8x13xbf16>
    tpu.vector_store %arg7[%c0_7, %c3], %11 {strides = array<i32>} : memref<56x16xbf16, #tpu.memory_space<vmem>>, vector<8x13xbf16>,
    %cst_8 = arith.constant 0.000000e+00 : bf16
    %13 = vector.broadcast %cst_8 : bf16 to vector<8x2xbf16>
    %c8 = arith.constant 8 : index
    %c0_9 = arith.constant 0 : index
    %14 = vector.load %arg7[%c8, %c0_9] : memref<56x16xbf16, #tpu.memory_space<vmem>>, vector<8x2xbf16>
    tpu.vector_store %arg7[%c8, %c0_9], %13 {strides = array<i32>} : memref<56x16xbf16, #tpu.memory_space<vmem>>, vector<8x2xbf16>,
    %15 = vector.extract_strided_slice %7 {offsets = [0, 0], sizes = [8, 14], strides = [1, 1]} : vector<8x16xf32> to vector<8x14xf32>
    %16 = arith.truncf %15 : vector<8x14xf32> to vector<8x14xbf16>
    %c8_10 = arith.constant 8 : index
    %c2 = arith.constant 2 : index
    %17 = vector.load %arg7[%c8_10, %c2] : memref<56x16xbf16, #tpu.memory_space<vmem>>, vector<8x14xbf16>
    tpu.vector_store %arg7[%c8_10, %c2], %16 {strides = array<i32>} : memref<56x16xbf16, #tpu.memory_space<vmem>>, vector<8x14xbf16>,
    %cst_11 = arith.constant 0.000000e+00 : bf16
    %18 = vector.broadcast %cst_11 : bf16 to vector<8x1xbf16>
    %c16 = arith.constant 16 : index
    %c0_12 = arith.constant 0 : index
    %19 = vector.load %arg7[%c16, %c0_12] : memref<56x16xbf16, #tpu.memory_space<vmem>>, vector<8x1xbf16>
    tpu.vector_store %arg7[%c16, %c0_12], %18 {strides = array<i32>} : memref<56x16xbf16, #tpu.memory_space<vmem>>, vector<8x1xbf16>,
    %20 = vector.extract_strided_slice %7 {offsets = [0, 0], sizes = [8, 15], strides = [1, 1]} : vector<8x16xf32> to vector<8x15xf32>
    %21 = arith.truncf %20 : vector<8x15xf32> to vector<8x15xbf16>
    %c16_13 = arith.constant 16 : index
    %c1_14 = arith.constant 1 : index
    %22 = vector.load %arg7[%c16_13, %c1_14] : memref<56x16xbf16, #tpu.memory_space<vmem>>, vector<8x15xbf16>
    tpu.vector_store %arg7[%c16_13, %c1_14], %21 {strides = array<i32>} : memref<56x16xbf16, #tpu.memory_space<vmem>>, vector<8x15xbf16>,
    %23 = arith.truncf %7 : vector<8x16xf32> to vector<8x16xbf16>
    %c24 = arith.constant 24 : index
    %c0_15 = arith.constant 0 : index
    %24 = vector.load %arg7[%c24, %c0_15] : memref<56x16xbf16, #tpu.memory_space<vmem>>, vector<8x16xbf16>
    tpu.vector_store %arg7[%c24, %c0_15], %23 {strides = array<i32>} : memref<56x16xbf16, #tpu.memory_space<vmem>>, vector<8x16xbf16>,
    %cst_16 = arith.constant 0.000000e+00 : bf16
    %25 = vector.broadcast %cst_16 : bf16 to vector<8x1xbf16>
    %c32 = arith.constant 32 : index
    %c15 = arith.constant 15 : index
    %26 = vector.load %arg7[%c32, %c15] : memref<56x16xbf16, #tpu.memory_space<vmem>>, vector<8x1xbf16>
    tpu.vector_store %arg7[%c32, %c15], %25 {strides = array<i32>} : memref<56x16xbf16, #tpu.memory_space<vmem>>, vector<8x1xbf16>,
    %27 = vector.extract_strided_slice %7 {offsets = [0, 1], sizes = [8, 15], strides = [1, 1]} : vector<8x16xf32> to vector<8x15xf32>
    %28 = arith.truncf %27 : vector<8x15xf32> to vector<8x15xbf16>
    %c32_17 = arith.constant 32 : index
    %c0_18 = arith.constant 0 : index
    %29 = vector.load %arg7[%c32_17, %c0_18] : memref<56x16xbf16, #tpu.memory_space<vmem>>, vector<8x15xbf16>
    tpu.vector_store %arg7[%c32_17, %c0_18], %28 {strides = array<i32>} : memref<56x16xbf16, #tpu.memory_space<vmem>>, vector<8x15xbf16>,
    %cst_19 = arith.constant 0.000000e+00 : bf16
    %30 = vector.broadcast %cst_19 : bf16 to vector<8x2xbf16>
    %c40 = arith.constant 40 : index
    %c14 = arith.constant 14 : index
    %31 = vector.load %arg7[%c40, %c14] : memref<56x16xbf16, #tpu.memory_space<vmem>>, vector<8x2xbf16>
    tpu.vector_store %arg7[%c40, %c14], %30 {strides = array<i32>} : memref<56x16xbf16, #tpu.memory_space<vmem>>, vector<8x2xbf16>,
    %32 = vector.extract_strided_slice %7 {offsets = [0, 2], sizes = [8, 14], strides = [1, 1]} : vector<8x16xf32> to vector<8x14xf32>
    %33 = arith.truncf %32 : vector<8x14xf32> to vector<8x14xbf16>
    %c40_20 = arith.constant 40 : index
    %c0_21 = arith.constant 0 : index
    %34 = vector.load %arg7[%c40_20, %c0_21] : memref<56x16xbf16, #tpu.memory_space<vmem>>, vector<8x14xbf16>
    tpu.vector_store %arg7[%c40_20, %c0_21], %33 {strides = array<i32>} : memref<56x16xbf16, #tpu.memory_space<vmem>>, vector<8x14xbf16>,
    %cst_22 = arith.constant 0.000000e+00 : bf16
    %35 = vector.broadcast %cst_22 : bf16 to vector<8x3xbf16>
    %c48 = arith.constant 48 : index
    %c13 = arith.constant 13 : index
    %36 = vector.load %arg7[%c48, %c13] : memref<56x16xbf16, #tpu.memory_space<vmem>>, vector<8x3xbf16>
    tpu.vector_store %arg7[%c48, %c13], %35 {strides = array<i32>} : memref<56x16xbf16, #tpu.memory_space<vmem>>, vector<8x3xbf16>,
    %37 = vector.extract_strided_slice %7 {offsets = [0, 3], sizes = [8, 13], strides = [1, 1]} : vector<8x16xf32> to vector<8x13xf32>
    %38 = arith.truncf %37 : vector<8x13xf32> to vector<8x13xbf16>
    %c48_23 = arith.constant 48 : index
    %c0_24 = arith.constant 0 : index
    %39 = vector.load %arg7[%c48_23, %c0_24] : memref<56x16xbf16, #tpu.memory_space<vmem>>, vector<8x13xbf16>
    tpu.vector_store %arg7[%c48_23, %c0_24], %38 {strides = array<i32>} : memref<56x16xbf16, #tpu.memory_space<vmem>>, vector<8x13xbf16>,
    %c0_25 = arith.constant 0 : index
    %c0_26 = arith.constant 0 : index
    %40 = vector.load %arg4[%c0_25, %c0_26] : memref<8x56xbf16, #tpu.memory_space<vmem>>, vector<8x56xbf16>
    %c0_27 = arith.constant 0 : index
    %c0_28 = arith.constant 0 : index
    %41 = vector.load %arg7[%c0_27, %c0_28] : memref<56x16xbf16, #tpu.memory_space<vmem>>, vector<56x16xbf16>
    %cst_29 = arith.constant dense<0.000000e+00> : vector<8x16xf32>
    %42 = tpu.matmul %40, %41, %cst_29 {dimension_numbers = #tpu.dot_dimension_numbers<[1], [0], [0], [1], [0, 0, 1, 1], [], []>} : vector<8x56xbf16>, vector<56x16xbf16>, vector<8x16xf32> -> vector<8x16xf32>
    %c0_30 = arith.constant 0 : index
    %c0_31 = arith.constant 0 : index
    %c0_32 = arith.constant 0 : index
    %43 = vector.load %arg2[%c0_30, %c0_31, %c0_32] : memref<1x8x16xf32, #tpu.memory_space<vmem>>, vector<1x8x16xf32>
    %44 = vector.shape_cast %43 : vector<1x8x16xf32> to vector<8x16xf32>
    %45 = arith.addf %42, %44 : vector<8x16xf32>
    %cst_33 = arith.constant 0.000000e+00 : f32
    %46 = vector.broadcast %cst_33 : f32 to vector<8x16xf32>
    %47 = arith.maximumf %45, %46 : vector<8x16xf32>
    %c0_34 = arith.constant 0 : index
    %c0_35 = arith.constant 0 : index
    %c0_36 = arith.constant 0 : index
    %48 = vector.load %arg5[%c0_34, %c0_35, %c0_36] : memref<1x8x16xf32, #tpu.memory_space<vmem>>, vector<1x8x16xf32>
    %49 = vector.shape_cast %48 : vector<1x8x16xf32> to vector<8x16xf32>
    %50 = vector.shape_cast %47 : vector<8x16xf32> to vector<1x8x16xf32>
    tpu.vector_store %arg5[%c0_34, %c0_35, %c0_36], %50 {strides = array<i32>} : memref<1x8x16xf32, #tpu.memory_space<vmem>>, vector<1x8x16xf32>,
    %cst_37 = arith.constant dense<0.000000e+00> : vector<8xf32>
    %51 = vector.multi_reduction <add>, %47, %cst_37 [1] : vector<8x16xf32> to vector<8xf32>
    %52 = vector.shape_cast %51 : vector<8xf32> to vector<8x1xf32>
    %cst_38 = arith.constant 6.250000e-02 : f32
    %53 = vector.broadcast %cst_38 : f32 to vector<8x1xf32>
    %54 = arith.mulf %52, %53 : vector<8x1xf32>
    %55 = vector.broadcast %54 : vector<8x1xf32> to vector<8x16xf32>
    %56 = arith.subf %47, %55 : vector<8x16xf32>
    %c0_39 = arith.constant 0 : index
    %c0_40 = arith.constant 0 : index
    %c0_41 = arith.constant 0 : index
    %57 = vector.load %arg6[%c0_39, %c0_40, %c0_41] : memref<1x8x2xf32, #tpu.memory_space<vmem>>, vector<1x8x1xf32>
    %58 = vector.shape_cast %57 : vector<1x8x1xf32> to vector<8x1xf32>
    %59 = vector.shape_cast %52 : vector<8x1xf32> to vector<1x8x1xf32>
    tpu.vector_store %arg6[%c0_39, %c0_40, %c0_41], %59 {strides = array<i32>} : memref<1x8x2xf32, #tpu.memory_space<vmem>>, vector<1x8x1xf32>,
    %60 = arith.mulf %56, %56 : vector<8x16xf32>
    %cst_42 = arith.constant dense<0.000000e+00> : vector<8xf32>
    %61 = vector.multi_reduction <add>, %60, %cst_42 [1] : vector<8x16xf32> to vector<8xf32>
    %62 = vector.shape_cast %61 : vector<8xf32> to vector<8x1xf32>
    %c0_43 = arith.constant 0 : index
    %c0_44 = arith.constant 0 : index
    %c1_45 = arith.constant 1 : index
    %63 = vector.load %arg6[%c0_43, %c0_44, %c1_45] : memref<1x8x2xf32, #tpu.memory_space<vmem>>, vector<1x8x1xf32>
    %64 = vector.shape_cast %63 : vector<1x8x1xf32> to vector<8x1xf32>
    %65 = vector.shape_cast %62 : vector<8x1xf32> to vector<1x8x1xf32>
    tpu.vector_store %arg6[%c0_43, %c0_44, %c1_45], %65 {strides = array<i32>} : memref<1x8x2xf32, #tpu.memory_space<vmem>>, vector<1x8x1xf32>,
    return
  }
  func.func @transform_0(%arg0: i32) -> (i32, i32, i32) {
    %c0_i32 = arith.constant 0 : i32
    %c0_i32_0 = arith.constant 0 : i32
    %c0_i32_1 = arith.constant 0 : i32
    return %arg0, %c0_i32, %c0_i32_0 : i32, i32, i32
  }
  func.func @transform_1(%arg0: i32) -> (i32, i32, i32) {
    %c0_i32 = arith.constant 0 : i32
    %c0_i32_0 = arith.constant 0 : i32
    %c0_i32_1 = arith.constant 0 : i32
    return %arg0, %c0_i32, %c0_i32_0 : i32, i32, i32
  }
  func.func @transform_2(%arg0: i32) -> (i32, i32) {
    %c0_i32 = arith.constant 0 : i32
    %c0_i32_0 = arith.constant 0 : i32
    %c0_i32_1 = arith.constant 0 : i32
    return %c0_i32, %c0_i32_0 : i32, i32
  }
  func.func @transform_3(%arg0: i32) -> (i32, i32) {
    %c0_i32 = arith.constant 0 : i32
    %c0_i32_0 = arith.constant 0 : i32
    %c0_i32_1 = arith.constant 0 : i32
    return %c0_i32, %c0_i32_0 : i32, i32
  }
  func.func @transform_4(%arg0: i32) -> (i32, i32, i32) {
    %c0_i32 = arith.constant 0 : i32
    %c0_i32_0 = arith.constant 0 : i32
    %c0_i32_1 = arith.constant 0 : i32
    return %arg0, %c0_i32, %c0_i32_0 : i32, i32, i32
  }
  func.func @transform_5(%arg0: i32) -> (i32, i32, i32) {
    %c0_i32 = arith.constant 0 : i32
    %c0_i32_0 = arith.constant 0 : i32
    %c0_i32_1 = arith.constant 0 : i32
    return %arg0, %c0_i32, %c0_i32_0 : i32, i32, i32
  }
}

</mosaic_0001>

<llo_original>
// kernel: resblock_forward.5
$region0: #{resblock_forward.5}
  #allocation0 [shape = 'u32[]', space=smem, size = 0x4, offset = 0x4, fixed_abs, tag = 'smem constant byte address 0x4 - core index']
  #allocation1 [shape = 'u32[144,128]{1,0:T(1,128)}', space=vmem, size = 0x12000, scoped, tag = 'internal scratch']
  %s0 = inlined_call_operand.vmem [shape: f32[2,8,16], index: 0, kind: input, shape index: {}]
  %s1 = inlined_call_operand.vmem [shape: f32[8,2], index: 1, kind: input, shape index: {}]
  %s2 = inlined_call_operand.hbm [shape: f32[2,8,16], index: 2, kind: output, shape index: {}]
  %s3 = sld [smem:[#allocation0]]
  $region41: #{resblock_forward.5} parent=0
    _
  %s5 = ssub.s32 1, %s3
  %s6 = scalar_select 0, %s5, %s3
  $region1: #{resblock_forward.5} parent=0
    #allocation2 [shape = 'u8[8192]{0}', space=vmem, size = 0x2000, scoped, tag = 'output window, operand 0']
    #allocation3 [shape = 's32[2]{0}', space=sflag, size = 0x8, scoped, tag = 'scoped memory for resblock_forward.5']
    %7 = vsyncpa [#allocation3], 0
    %s8 = scalar_lea.sflag [#allocation3], 1
    %9 = vsyncpa %s8, 0
    loop: start=0, step=1, limit=4
    $region2: #{resblock_forward.5} parent=1 // loop_pre_header
      _
    $region3: #{resblock_forward.5} parent=1 // loop_header
      %s11 = sphi 0, %s15
      %p12 = scmp.ge.s32.totalorder %s11, 4
      %s21 = sphi 0, %s23
      %s24 = sphi 0, %s21
      %s25 = sphi 0, %s24
      %s41 = sphi 0, %s25
      %s45 = sphi 0, %s45
      %s47 = sphi 0, %s45
      %s48 = sphi 0, %s47
      %s62 = sphi 0, %s48
      %s68 = sphi 0, %s70
      %s71 = sphi 0, %s68
      %s72 = sphi 0, %s71
      %s88 = sphi 0, %s72
    $region4: #{resblock_forward.5} parent=1 // loop_header_branch
      %14 = sbr.rel (%p12) target = $region8
    $region5: #{resblock_forward.5} parent=1 // loop_body
      %s16 = ssub.s32 %s11, 1
      %s17 = ssub.s32 %s11, 2
      %s18 = sadd.s32 %s11, 1
      %s19 = ssub.s32 %s11, %s18
      %p20 = scmp.eq.s32.totalorder %s19, 0
      %s22 = sadd.s32 %s21, 1
      %s23 = scalar_select %p20, %s21, %s22
      %p26 = pneg %p20
      %p27 = scmp.eq.s32.totalorder %s11, 1
      %p28 = por %p26, %p27
      %p29 = scmp.ne.s32.totalorder %s21, %s24
      %p30 = scmp.eq.s32.totalorder %s11, 0
      %p31 = por %p29, %p30
      %p32 = scmp.ne.s32.totalorder %s21, %s24
      %p33 = scmp.eq.s32.totalorder %s16, 1
      %p34 = por %p32, %p33
      %p35 = scmp.ne.s32.totalorder %s24, %s25
      %p36 = scmp.eq.s32.totalorder %s16, 0
      %p37 = por %p35, %p36
      %p38 = scmp.ne.s32.totalorder %s24, %s25
      %p39 = scmp.eq.s32.totalorder %s17, 1
      %p40 = por %p38, %p39
      %p42 = scmp.ne.s32.totalorder %s25, %s41
      %p43 = scmp.eq.s32.totalorder %s17, 0
      %p44 = por %p42, %p43
      %s46 = sadd.s32 %s45, 1
      %p49 = scmp.eq.s32.totalorder %s11, 1
      %p50 = scmp.ne.s32.totalorder %s45, %s47
      %p51 = scmp.eq.s32.totalorder %s11, 0
      %p52 = por %p50, %p51
      %p53 = scmp.ne.s32.totalorder %s45, %s47
      %p54 = scmp.eq.s32.totalorder %s16, 1
      %p55 = por %p53, %p54
      %p56 = scmp.ne.s32.totalorder %s47, %s48
      %p57 = scmp.eq.s32.totalorder %s16, 0
      %p58 = por %p56, %p57
      %p59 = scmp.ne.s32.totalorder %s47, %s48
      %p60 = scmp.eq.s32.totalorder %s17, 1
      %p61 = por %p59, %p60
      %p63 = scmp.ne.s32.totalorder %s48, %s62
      %p64 = scmp.eq.s32.totalorder %s17, 0
      %p65 = por %p63, %p64
      %s66 = ssub.s32 %s11, %s18
      %p67 = scmp.eq.s32.totalorder %s66, 0
      %s69 = sadd.s32 %s68, 1
      %s70 = scalar_select %p67, %s68, %s69
      %p73 = pneg %p67
      %p74 = scmp.eq.s32.totalorder %s11, 1
      %p75 = por %p73, %p74
      %p76 = scmp.ne.s32.totalorder %s68, %s71
      %p77 = scmp.eq.s32.totalorder %s11, 0
      %p78 = por %p76, %p77
      %p79 = scmp.ne.s32.totalorder %s68, %s71
      %p80 = scmp.eq.s32.totalorder %s16, 1
      %p81 = por %p79, %p80
      %p82 = scmp.ne.s32.totalorder %s71, %s72
      %p83 = scmp.eq.s32.totalorder %s16, 0
      %p84 = por %p82, %p83
      %p85 = scmp.ne.s32.totalorder %s71, %s72
      %p86 = scmp.eq.s32.totalorder %s17, 1
      %p87 = por %p85, %p86
      %p89 = scmp.ne.s32.totalorder %s72, %s88
      %p90 = scmp.eq.s32.totalorder %s17, 0
      %p91 = por %p89, %p90
      %p92 = scmp.le.s32.totalorder 1, %s11
      %p93 = scmp.lt.s32.totalorder %s11, 3
      %p94 = pnand %p92, %p93
      %p95 = pneg %p94
      // Predicated region
      $region9: #{resblock_forward.5} parent=5 // pred_check
        _
      $region10: #{resblock_forward.5} parent=5 // pred_check_branch
        %97 = sbr.rel (%p94) target = $region12
      $region11: #{resblock_forward.5} parent=5 // pred_region
        %s98 = ssub.s32 %s11, 1
        // Predicated region
        $region13: #{resblock_forward.5} parent=11 // pred_check
          %p99 = pneg %p58
        $region14: #{resblock_forward.5} parent=11 // pred_check_branch
          %101 = sbr.rel (%p99) target = $region16
        $region15: #{resblock_forward.5} parent=11 // pred_region
          _
        $region16: #{resblock_forward.5} parent=11 // pred_fallthru
          _
      $region12: #{resblock_forward.5} parent=5 // pred_fallthru
        _
      %p102 = scmp.lt.s32.totalorder %s11, 2
      // Predicated region
      $region17: #{resblock_forward.5} parent=5 // pred_check
        %p103 = pneg %p102
      $region18: #{resblock_forward.5} parent=5 // pred_check_branch
        %105 = sbr.rel (%p103) target = $region20
      $region19: #{resblock_forward.5} parent=5 // pred_region
        // Predicated region
        $region21: #{resblock_forward.5} parent=19 // pred_check
          %p106 = pneg %p31
        $region22: #{resblock_forward.5} parent=19 // pred_check_branch
          %108 = sbr.rel (%p106) target = $region24
        $region23: #{resblock_forward.5} parent=19 // pred_region
          %p109 = scmp.lt.s32.totalorder %s11, 1
          %s110 = scalar_select %p109, %s11, 1
          %s111 = smul.addr %s110, 8
          %s112 = scalar_lea.vmem %s0, %s111
        $region24: #{resblock_forward.5} parent=19 // pred_fallthru
          _
      $region20: #{resblock_forward.5} parent=5 // pred_fallthru
        _
      %p113 = scmp.le.s32.totalorder 1, %s11
      %p114 = scmp.lt.s32.totalorder %s11, 3
      %p115 = pnand %p113, %p114
      %p116 = pneg %p115
      // Predicated region
      $region25: #{resblock_forward.5} parent=5 // pred_check
        _
      $region26: #{resblock_forward.5} parent=5 // pred_check_branch
        %118 = sbr.rel (%p115) target = $region28
      $region27: #{resblock_forward.5} parent=5 // pred_region
        %s119 = ssub.s32 %s11, 1
        %p120 = scmp.lt.s32.totalorder %s16, 1
        %s121 = scalar_select %p120, %s16, 1
        %s122 = smul.addr %s121, 8
        %s123 = scalar_lea.vmem %s0, %s122
        %p124 = pneg %p37
        %p125 = pneg %p34
        %p126 = pneg %p58
        %p127 = pneg %p55
        %p128 = pneg %p84
        %p129 = pneg %p81
        %s130 = sand.u32 %s71, 1
        %s131 = scalar_lea.sflag [#allocation3], %s130
        %s132 = sand.u32 %s71, 1
        %s133 = smul.addr %s132, 8
        %s134 = scalar_lea.vmem [#allocation2], %s133
        %p135 = scmp.lt.s32.totalorder %s16, 1
        %s136 = scalar_select %p135, %s16, 1
        %s137 = smul.addr %s136, 8
        %s138 = scalar_lea.vmem %s0, %s137
        %v139 = vld [vmem:[%s138] sm:$0xff]
        %v140 = vld [vmem:[%s1] sm:$0xff]
        %142 = vset.pattern.permute.xlu0 0
        %143 = vperm.xlu0 %142, %v140
        %v144 = vpop.permute.xlu0 %143
        %v146 = vmul.f32 %v139, %v144
        %147 = vset.pattern.permute.xlu0 1
        %148 = vperm.xlu0 %147, %v140
        %v149 = vpop.permute.xlu0 %148
        %v151 = vadd.f32 %v146, %v149
        %vm152 = vcmask 130048
        %153 = vst.msk [vmem:[%s134] sm:$0xff] %vm152, %v151
        %s154 = sand.u32 %s71, 1
        %s155 = scalar_lea.sflag [#allocation3], %s154
        %s156 = sand.u32 %s71, 1
        %s157 = smul.addr %s156, 8
        %s158 = scalar_lea.vmem [#allocation2], %s157
        // Predicated region
        $region29: #{resblock_forward.5} parent=27 // pred_check
          %p159 = pneg %p81
        $region30: #{resblock_forward.5} parent=27 // pred_check_branch
          %161 = sbr.rel (%p159) target = $region32
        $region31: #{resblock_forward.5} parent=27 // pred_region
          %s163 = ssub.s32 128, 128
          %164 = vsyncadd %s155, %s163
          %s165 = smul.addr %s16, 128
          %s166 = scalar_lea.hbm %s2, %s165
          %s168 = sshll.u32 %s158, 4
          %s169 = int_to_ptr.vmem [resolvable:$true] %s168
          %171 = dma.vmem_to_hbm [thread:$0]  %s169, 128, %s166, %s155
        $region32: #{resblock_forward.5} parent=27 // pred_fallthru
          _
      $region28: #{resblock_forward.5} parent=5 // pred_fallthru
        _
      %p172 = scmp.le.s32.totalorder 2, %s11
      // Predicated region
      $region33: #{resblock_forward.5} parent=5 // pred_check
        %p173 = pneg %p172
      $region34: #{resblock_forward.5} parent=5 // pred_check_branch
        %175 = sbr.rel (%p173) target = $region36
      $region35: #{resblock_forward.5} parent=5 // pred_region
        %s176 = ssub.s32 %s11, 2
        // Predicated region
        $region37: #{resblock_forward.5} parent=35 // pred_check
          %p177 = pneg %p87
        $region38: #{resblock_forward.5} parent=35 // pred_check_branch
          %179 = sbr.rel (%p177) target = $region40
        $region39: #{resblock_forward.5} parent=35 // pred_region
          %s180 = sand.u32 %s72, 1
          %s181 = scalar_lea.sflag [#allocation3], %s180
          %s182 = sand.u32 %s72, 1
          %s183 = smul.addr %s182, 8
          %s184 = scalar_lea.vmem [#allocation2], %s183
          %185 = dma.done %s181, 128
        $region40: #{resblock_forward.5} parent=35 // pred_fallthru
          _
      $region36: #{resblock_forward.5} parent=5 // pred_fallthru
        _
    $region6: #{resblock_forward.5} parent=1 // loop_footer
      %s15 = sadd.s32 1, %s11
    $region7: #{resblock_forward.5} parent=1 // loop_footer_branch
      %10 = sbr.rel target = $region3
    $region8: #{resblock_forward.5} parent=1 // loop_exit
      _
    %186 = vsyncpa [#allocation3], 1
    %s187 = scalar_lea.sflag [#allocation3], 1
    %188 = vsyncpa %s187, 1

// kernel: resblock_forward.3
$region0: #{resblock_forward.3}
  #allocation0 [shape = 'u32[]', space=smem, size = 0x4, offset = 0x4, fixed_abs, tag = 'smem constant byte address 0x4 - core index']
  #allocation1 [shape = 'u32[144,128]{1,0:T(1,128)}', space=vmem, size = 0x12000, scoped, tag = 'internal scratch']
  #allocation2 [shape = 'bf16[56,16]{1,0:T(8,128)(2,1)}', space=vmem, size = 0x3800, scoped, tag = 'scratch operand']
  %s0 = inlined_call_operand.vmem [shape: f32[2,8,16], index: 0, kind: input, shape index: {}]
  %s1 = inlined_call_operand.vmem [shape: bf16[8,56], index: 1, kind: input, shape index: {}]
  %s2 = inlined_call_operand.vmem [shape: f32[2,8,16], index: 2, kind: output, shape index: {0}]
  %s3 = inlined_call_operand.vmem [shape: f32[2,8,2], index: 3, kind: output, shape index: {1}]
  %4 = xla_tuple %s2, %s3
  %s5 = sld [smem:[#allocation0]]
  $region49: #{resblock_forward.3} parent=0
    _
  %s7 = ssub.s32 1, %s5
  %s8 = scalar_select 0, %s7, %s5
  loop: start=0, step=1, limit=4
  $region2: #{resblock_forward.3} parent=0 // loop_pre_header
    _
  $region3: #{resblock_forward.3} parent=0 // loop_header
    %s10 = sphi 0, %s14
    %p11 = scmp.ge.s32.totalorder %s10, 4
    %s20 = sphi 0, %s22
    %s23 = sphi 0, %s20
    %s24 = sphi 0, %s23
    %s40 = sphi 0, %s24
    %s44 = sphi 0, %s44
    %s46 = sphi 0, %s44
    %s47 = sphi 0, %s46
    %s61 = sphi 0, %s47
    %s67 = sphi 0, %s69
    %s70 = sphi 0, %s67
    %s71 = sphi 0, %s70
    %s87 = sphi 0, %s71
    %s93 = sphi 0, %s95
    %s96 = sphi 0, %s93
    %s97 = sphi 0, %s96
    %s113 = sphi 0, %s97
  $region4: #{resblock_forward.3} parent=0 // loop_header_branch
    %13 = sbr.rel (%p11) target = $region8
  $region5: #{resblock_forward.3} parent=0 // loop_body
    %s15 = ssub.s32 %s10, 1
    %s16 = ssub.s32 %s10, 2
    %s17 = sadd.s32 %s10, 1
    %s18 = ssub.s32 %s10, %s17
    %p19 = scmp.eq.s32.totalorder %s18, 0
    %s21 = sadd.s32 %s20, 1
    %s22 = scalar_select %p19, %s20, %s21
    %p25 = pneg %p19
    %p26 = scmp.eq.s32.totalorder %s10, 1
    %p27 = por %p25, %p26
    %p28 = scmp.ne.s32.totalorder %s20, %s23
    %p29 = scmp.eq.s32.totalorder %s10, 0
    %p30 = por %p28, %p29
    %p31 = scmp.ne.s32.totalorder %s20, %s23
    %p32 = scmp.eq.s32.totalorder %s15, 1
    %p33 = por %p31, %p32
    %p34 = scmp.ne.s32.totalorder %s23, %s24
    %p35 = scmp.eq.s32.totalorder %s15, 0
    %p36 = por %p34, %p35
    %p37 = scmp.ne.s32.totalorder %s23, %s24
    %p38 = scmp.eq.s32.totalorder %s16, 1
    %p39 = por %p37, %p38
    %p41 = scmp.ne.s32.totalorder %s24, %s40
    %p42 = scmp.eq.s32.totalorder %s16, 0
    %p43 = por %p41, %p42
    %s45 = sadd.s32 %s44, 1
    %p48 = scmp.eq.s32.totalorder %s10, 1
    %p49 = scmp.ne.s32.totalorder %s44, %s46
    %p50 = scmp.eq.s32.totalorder %s10, 0
    %p51 = por %p49, %p50
    %p52 = scmp.ne.s32.totalorder %s44, %s46
    %p53 = scmp.eq.s32.totalorder %s15, 1
    %p54 = por %p52, %p53
    %p55 = scmp.ne.s32.totalorder %s46, %s47
    %p56 = scmp.eq.s32.totalorder %s15, 0
    %p57 = por %p55, %p56
    %p58 = scmp.ne.s32.totalorder %s46, %s47
    %p59 = scmp.eq.s32.totalorder %s16, 1
    %p60 = por %p58, %p59
    %p62 = scmp.ne.s32.totalorder %s47, %s61
    %p63 = scmp.eq.s32.totalorder %s16, 0
    %p64 = por %p62, %p63
    %s65 = ssub.s32 %s10, %s17
    %p66 = scmp.eq.s32.totalorder %s65, 0
    %s68 = sadd.s32 %s67, 1
    %s69 = scalar_select %p66, %s67, %s68
    %p72 = pneg %p66
    %p73 = scmp.eq.s32.totalorder %s10, 1
    %p74 = por %p72, %p73
    %p75 = scmp.ne.s32.totalorder %s67, %s70
    %p76 = scmp.eq.s32.totalorder %s10, 0
    %p77 = por %p75, %p76
    %p78 = scmp.ne.s32.totalorder %s67, %s70
    %p79 = scmp.eq.s32.totalorder %s15, 1
    %p80 = por %p78, %p79
    %p81 = scmp.ne.s32.totalorder %s70, %s71
    %p82 = scmp.eq.s32.totalorder %s15, 0
    %p83 = por %p81, %p82
    %p84 = scmp.ne.s32.totalorder %s70, %s71
    %p85 = scmp.eq.s32.totalorder %s16, 1
    %p86 = por %p84, %p85
    %p88 = scmp.ne.s32.totalorder %s71, %s87
    %p89 = scmp.eq.s32.totalorder %s16, 0
    %p90 = por %p88, %p89
    %s91 = ssub.s32 %s10, %s17
    %p92 = scmp.eq.s32.totalorder %s91, 0
    %s94 = sadd.s32 %s93, 1
    %s95 = scalar_select %p92, %s93, %s94
    %p98 = pneg %p92
    %p99 = scmp.eq.s32.totalorder %s10, 1
    %p100 = por %p98, %p99
    %p101 = scmp.ne.s32.totalorder %s93, %s96
    %p102 = scmp.eq.s32.totalorder %s10, 0
    %p103 = por %p101, %p102
    %p104 = scmp.ne.s32.totalorder %s93, %s96
    %p105 = scmp.eq.s32.totalorder %s15, 1
    %p106 = por %p104, %p105
    %p107 = scmp.ne.s32.totalorder %s96, %s97
    %p108 = scmp.eq.s32.totalorder %s15, 0
    %p109 = por %p107, %p108
    %p110 = scmp.ne.s32.totalorder %s96, %s97
    %p111 = scmp.eq.s32.totalorder %s16, 1
    %p112 = por %p110, %p111
    %p114 = scmp.ne.s32.totalorder %s97, %s113
    %p115 = scmp.eq.s32.totalorder %s16, 0
    %p116 = por %p114, %p115
    %p117 = scmp.le.s32.totalorder 1, %s10
    %p118 = scmp.lt.s32.totalorder %s10, 3
    %p119 = pnand %p117, %p118
    %p120 = pneg %p119
    // Predicated region
    $region9: #{resblock_forward.3} parent=5 // pred_check
      _
    $region10: #{resblock_forward.3} parent=5 // pred_check_branch
      %122 = sbr.rel (%p119) target = $region12
    $region11: #{resblock_forward.3} parent=5 // pred_region
      %s123 = ssub.s32 %s10, 1
      // Predicated region
      $region13: #{resblock_forward.3} parent=11 // pred_check
        %p124 = pneg %p57
      $region14: #{resblock_forward.3} parent=11 // pred_check_branch
        %126 = sbr.rel (%p124) target = $region16
      $region15: #{resblock_forward.3} parent=11 // pred_region
        _
      $region16: #{resblock_forward.3} parent=11 // pred_fallthru
        _
    $region12: #{resblock_forward.3} parent=5 // pred_fallthru
      _
    %p127 = scmp.lt.s32.totalorder %s10, 2
    // Predicated region
    $region17: #{resblock_forward.3} parent=5 // pred_check
      %p128 = pneg %p127
    $region18: #{resblock_forward.3} parent=5 // pred_check_branch
      %130 = sbr.rel (%p128) target = $region20
    $region19: #{resblock_forward.3} parent=5 // pred_region
      // Predicated region
      $region21: #{resblock_forward.3} parent=19 // pred_check
        %p131 = pneg %p30
      $region22: #{resblock_forward.3} parent=19 // pred_check_branch
        %133 = sbr.rel (%p131) target = $region24
      $region23: #{resblock_forward.3} parent=19 // pred_region
        %p134 = scmp.lt.s32.totalorder %s10, 1
        %s135 = scalar_select %p134, %s10, 1
        %s136 = smul.addr %s135, 8
        %s137 = scalar_lea.vmem %s0, %s136
      $region24: #{resblock_forward.3} parent=19 // pred_fallthru
        _
    $region20: #{resblock_forward.3} parent=5 // pred_fallthru
      _
    %p138 = scmp.le.s32.totalorder 1, %s10
    %p139 = scmp.lt.s32.totalorder %s10, 3
    %p140 = pnand %p138, %p139
    %p141 = pneg %p140
    // Predicated region
    $region25: #{resblock_forward.3} parent=5 // pred_check
      _
    $region26: #{resblock_forward.3} parent=5 // pred_check_branch
      %143 = sbr.rel (%p140) target = $region28
    $region27: #{resblock_forward.3} parent=5 // pred_region
      %s144 = ssub.s32 %s10, 1
      %p145 = scmp.lt.s32.totalorder %s15, 1
      %s146 = scalar_select %p145, %s15, 1
      %s147 = smul.addr %s146, 8
      %s148 = scalar_lea.vmem %s0, %s147
      %p149 = pneg %p36
      %p150 = pneg %p33
      %p151 = pneg %p57
      %p152 = pneg %p54
      %p153 = pneg %p83
      %p154 = pneg %p80
      %p155 = scmp.lt.s32.totalorder %s15, 1
      %s156 = scalar_select %p155, %s15, 1
      %s157 = smul.addr %s156, 8
      %s158 = scalar_lea.vmem %s2, %s157
      %p159 = pneg %p109
      %p160 = pneg %p106
      %p161 = scmp.lt.s32.totalorder %s15, 1
      %s162 = scalar_select %p161, %s15, 1
      %s163 = smul.addr %s162, 8
      %s164 = scalar_lea.vmem %s3, %s163
      %p165 = scmp.lt.s32.totalorder %s15, 1
      %s166 = scalar_select %p165, %s15, 1
      %s167 = smul.addr %s166, 8
      %s168 = scalar_lea.vmem %s0, %s167
      %p169 = scmp.lt.s32.totalorder %s15, 1
      %s170 = scalar_select %p169, %s15, 1
      %s171 = smul.addr %s170, 8
      %s172 = scalar_lea.vmem %s2, %s171
      %p173 = scmp.lt.s32.totalorder %s15, 1
      %s174 = scalar_select %p173, %s15, 1
      %s175 = smul.addr %s174, 8
      %s176 = scalar_lea.vmem %s3, %s175
      %v178 = vld [vmem:[%s168] sm:$0xff]
      %vm179 = vcmask 19456
      %180 = vst.msk [vmem:[#allocation2] sm:$0xf] %vm179, 0
      %v181 = vpack.c.bf16 %v178, %v178
      %v183 = vunpack.c.l.b16 %v181
      %v184 = vpack.c.b16 %v183, %v183
      %185 = vrot.lane.b32.xlu0 %v184, 3
      %v186 = vpop.permute.xlu0 %185
      %vm188 = vcmask 125976
      %189 = vst.msk [vmem:[#allocation2] sm:$0xf] %vm188, %v186
      %vm190 = vcmask 11264
      %191 = vst.msk [vmem:[#allocation2 + $0x4] sm:$0xf] %vm190, 0
      %192 = vrot.lane.b32.xlu0 %v184, 2
      %v193 = vpop.permute.xlu0 %192
      %vm195 = vcmask 125968
      %196 = vst.msk [vmem:[#allocation2 + $0x4] sm:$0xf] %vm195, %v193
      %vm197 = vcmask 3072
      %198 = vst.msk [vmem:[#allocation2 + $0x8] sm:$0xf] %vm197, 0
      %199 = vrot.lane.b32.xlu0 %v184, 1
      %v200 = vpop.permute.xlu0 %199
      %vm202 = vcmask 125960
      %203 = vst.msk [vmem:[#allocation2 + $0x8] sm:$0xf] %vm202, %v200
      %vm204 = vcmask 125952
      %205 = vst.msk [vmem:[#allocation2 + $0xc] sm:$0xf] %vm204, %v181
      %vm206 = vcmask 126072
      %207 = vst.msk [vmem:[#allocation2 + $0x10] sm:$0xf] %vm206, 0
      %208 = vrot.lane.b32.xlu0 %v184, 127
      %v209 = vpop.permute.xlu0 %208
      %vm211 = vcmask 117760
      %212 = vst.msk [vmem:[#allocation2 + $0x10] sm:$0xf] %vm211, %v209
      %vm213 = vcmask 126064
      %214 = vst.msk [vmem:[#allocation2 + $0x14] sm:$0xf] %vm213, 0
      %215 = vrot.lane.b32.xlu0 %v184, 126
      %v216 = vpop.permute.xlu0 %215
      %vm218 = vcmask 109568
      %219 = vst.msk [vmem:[#allocation2 + $0x14] sm:$0xf] %vm218, %v216
      %vm220 = vcmask 126056
      %221 = vst.msk [vmem:[#allocation2 + $0x18] sm:$0xf] %vm220, 0
      %222 = vrot.lane.b32.xlu0 %v184, 125
      %v223 = vpop.permute.xlu0 %222
      %vm225 = vcmask 101376
      %226 = vst.msk [vmem:[#allocation2 + $0x18] sm:$0xf] %vm225, %v223
      %v227 = vld [vmem:[%s1] sm:$0xf]
      %v228 = vld [vmem:[#allocation2] sm:$0xf]
      %v229 = vld [vmem:[#allocation2 + $0x4] sm:$0xf]
      %v230 = vld [vmem:[#allocation2 + $0x8] sm:$0xf]
      %v231 = vld [vmem:[#allocation2 + $0xc] sm:$0xf]
      %v232 = vld [vmem:[#allocation2 + $0x10] sm:$0xf]
      %v233 = vld [vmem:[#allocation2 + $0x14] sm:$0xf]
      %v234 = vld [vmem:[#allocation2 + $0x18] sm:$0xf]
      %v242 = vunpack.c.l.b16 %v228
      %v243 = vunpack.c.l.b16 %v229
      %v244 = vunpack.c.l.b16 %v230
      %v245 = vunpack.c.l.b16 %v231
      %v246 = vunpack.c.l.b16 %v232
      %v247 = vunpack.c.l.b16 %v233
      %v248 = vunpack.c.l.b16 %v234
      %v249 = vpack.c.b16 %v243, %v242
      %v250 = vpack.c.b16 %v245, %v244
      %v251 = vpack.c.b16 %v247, %v246
      %v252 = vpack.c.b16 %v248, %v248
      %vm256 = vcmask 457728
      %v258 = vsel %vm256, %v227, 0
      %vm260 = vcmask 1043456
      %v262 = vsel %vm260, %v252, 0
      %264 = vmatprep.subr.bf16.mxu0 0
      %265 = vmatpush1.bf16.msra.mxu0 0
      %266 = vmatprep.subr.bf16.mxu0 0
      %267 = vmatpush1.bf16.msra.mxu0 0
      %268 = vmatprep.subr.bf16.mxu0 0
      %269 = vmatpush1.bf16.msra.mxu0 0
      %270 = vmatprep.subr.bf16.mxu0 0
      %271 = vmatpush1.bf16.msra.mxu0 0
      %272 = vmatprep.subr.bf16.mxu0 0
      %273 = vmatpush1.bf16.msra.mxu0 %v262
      %274 = vmatprep.subr.bf16.mxu0 0
      %275 = vmatpush1.bf16.msra.mxu0 %v251
      %276 = vmatprep.subr.bf16.mxu0 0
      %277 = vmatpush1.bf16.msra.mxu0 %v250
      %278 = vmatprep.subr.bf16.mxu0 0
      %279 = vmatpush1.bf16.msra.mxu0 %v249
      %280 = vmatprep.subr.bf16.mxu0 0
      %281 = vmatpush2.bf16.msra.mxu0 0
      %282 = vmatprep.subr.bf16.mxu0 0
      %283 = vmatpush2.bf16.msra.mxu0 0
      %284 = vmatprep.subr.bf16.mxu0 0
      %285 = vmatpush2.bf16.msra.mxu0 0
      %286 = vmatprep.subr.bf16.mxu0 0
      %287 = vmatpush2.bf16.msra.mxu0 0
      %288 = vmatprep.subr.bf16.mxu0 0
      %289 = vmatpush2.bf16.msra.mxu0 0
      %290 = vmatprep.subr.bf16.mxu0 0
      %291 = vmatpush2.bf16.msra.mxu0 0
      %292 = vmatprep.subr.bf16.mxu0 0
      %293 = vmatpush2.bf16.msra.mxu0 0
      %294 = vmatprep.subr.bf16.mxu0 0
      %295 = vmatpush2.bf16.msra.mxu0 0
      %296 = vmatprep.mubr.bf16.mxu0 0
      %297 = vmatmul.mubr.bf16.gmra.mxu0 %v258
      %v298 = vpop.f32.mrf.mxu0
      %v299 = vadd.f32 0.0, %v298
      %v300 = vpop.f32.mrf.mxu0
      %v301 = vpop.f32.mrf.mxu0
      %v302 = vpop.f32.mrf.mxu0
      %303 = vdwg.mxu0
      %v304 = vmax.f32 %v299, 0.0
      %vm305 = vcmask 130048
      %306 = vst.msk [vmem:[%s172] sm:$0xff] %vm305, %v304
      %v307 = vsel %vm305, %v304, 0.0
      %308 = vadd.xlane.f32.xlu0 %v307
      %v309 = vpop.xlane.xlu0 %308
      %v310 = vmul.f32 %v309, 0.0625
      %v311 = vsub.f32 %v304, %v310
      %vm312 = vcmask 7168
      %313 = vst.msk [vmem:[%s176] sm:$0xff] %vm312, %v309
      %v314 = vmul.f32 %v311, %v311
      %v315 = vsel %vm305, %v314, 0.0
      %316 = vadd.xlane.f32.xlu0 %v315
      %v317 = vpop.xlane.xlu0 %316
      %vm318 = vcmask 15368
      %319 = vst.msk [vmem:[%s176] sm:$0xff] %vm318, %v317
      %p320 = scmp.lt.s32.totalorder %s15, 1
      %s321 = scalar_select %p320, %s15, 1
      %s322 = smul.addr %s321, 8
      %s323 = scalar_lea.vmem %s2, %s322
      %p324 = scmp.lt.s32.totalorder %s15, 1
      %s325 = scalar_select %p324, %s15, 1
      %s326 = smul.addr %s325, 8
      %s327 = scalar_lea.vmem %s3, %s326
      // Predicated region
      $region29: #{resblock_forward.3} parent=27 // pred_check
        %p328 = pneg %p80
      $region30: #{resblock_forward.3} parent=27 // pred_check_branch
        %330 = sbr.rel (%p328) target = $region32
      $region31: #{resblock_forward.3} parent=27 // pred_region
        _
      $region32: #{resblock_forward.3} parent=27 // pred_fallthru
        _
      // Predicated region
      $region33: #{resblock_forward.3} parent=27 // pred_check
        %p331 = pneg %p106
      $region34: #{resblock_forward.3} parent=27 // pred_check_branch
        %333 = sbr.rel (%p331) target = $region36
      $region35: #{resblock_forward.3} parent=27 // pred_region
        _
      $region36: #{resblock_forward.3} parent=27 // pred_fallthru
        _
    $region28: #{resblock_forward.3} parent=5 // pred_fallthru
      _
    %p334 = scmp.le.s32.totalorder 2, %s10
    // Predicated region
    $region37: #{resblock_forward.3} parent=5 // pred_check
      %p335 = pneg %p334
    $region38: #{resblock_forward.3} parent=5 // pred_check_branch
      %337 = sbr.rel (%p335) target = $region40
    $region39: #{resblock_forward.3} parent=5 // pred_region
      %s338 = ssub.s32 %s10, 2
      // Predicated region
      $region41: #{resblock_forward.3} parent=39 // pred_check
        %p339 = pneg %p86
      $region42: #{resblock_forward.3} parent=39 // pred_check_branch
        %341 = sbr.rel (%p339) target = $region44
      $region43: #{resblock_forward.3} parent=39 // pred_region
        %p342 = scmp.lt.s32.totalorder %s16, 1
        %s343 = scalar_select %p342, %s16, 1
        %s344 = smul.addr %s343, 8
        %s345 = scalar_lea.vmem %s2, %s344
      $region44: #{resblock_forward.3} parent=39 // pred_fallthru
        _
      // Predicated region
      $region45: #{resblock_forward.3} parent=39 // pred_check
        %p346 = pneg %p112
      $region46: #{resblock_forward.3} parent=39 // pred_check_branch
        %348 = sbr.rel (%p346) target = $region48
      $region47: #{resblock_forward.3} parent=39 // pred_region
        %p349 = scmp.lt.s32.totalorder %s16, 1
        %s350 = scalar_select %p349, %s16, 1
        %s351 = smul.addr %s350, 8
        %s352 = scalar_lea.vmem %s3, %s351
      $region48: #{resblock_forward.3} parent=39 // pred_fallthru
        _
    $region40: #{resblock_forward.3} parent=5 // pred_fallthru
      _
  $region6: #{resblock_forward.3} parent=0 // loop_footer
    %s14 = sadd.s32 1, %s10
  $region7: #{resblock_forward.3} parent=0 // loop_footer_branch
    %9 = sbr.rel target = $region3
  $region8: #{resblock_forward.3} parent=0 // loop_exit
    _

// kernel: resblock_forward.4
$region0: #{resblock_forward.4}
  #allocation0 [shape = 'u32[]', space=smem, size = 0x4, offset = 0x4, fixed_abs, tag = 'smem constant byte address 0x4 - core index']
  #allocation1 [shape = 'u32[144,128]{1,0:T(1,128)}', space=vmem, size = 0x12000, scoped, tag = 'internal scratch']
  #allocation2 [shape = 'bf16[56,16]{1,0:T(8,128)(2,1)}', space=vmem, size = 0x3800, scoped, tag = 'scratch operand']
  %s0 = inlined_call_operand.vmem [shape: f32[2,8,16], index: 0, kind: input, shape index: {}]
  %s1 = inlined_call_operand.vmem [shape: f32[2,8,16], index: 1, kind: input, shape index: {}]
  %s2 = inlined_call_operand.vmem [shape: f32[8,2], index: 2, kind: input, shape index: {}]
  %s3 = inlined_call_operand.vmem [shape: bf16[8,56], index: 3, kind: input, shape index: {}]
  %s4 = inlined_call_operand.vmem [shape: f32[2,8,16], index: 4, kind: output, shape index: {0}]
  %s5 = inlined_call_operand.vmem [shape: f32[2,8,2], index: 5, kind: output, shape index: {1}]
  %6 = xla_tuple %s4, %s5
  %s7 = sld [smem:[#allocation0]]
  $region57: #{resblock_forward.4} parent=0
    _
  %s9 = ssub.s32 1, %s7
  %s10 = scalar_select 0, %s9, %s7
  loop: start=0, step=1, limit=4
  $region2: #{resblock_forward.4} parent=0 // loop_pre_header
    _
  $region3: #{resblock_forward.4} parent=0 // loop_header
    %s12 = sphi 0, %s16
    %p13 = scmp.ge.s32.totalorder %s12, 4
    %s22 = sphi 0, %s24
    %s25 = sphi 0, %s22
    %s26 = sphi 0, %s25
    %s42 = sphi 0, %s26
    %s48 = sphi 0, %s50
    %s51 = sphi 0, %s48
    %s52 = sphi 0, %s51
    %s68 = sphi 0, %s52
    %s72 = sphi 0, %s72
    %s74 = sphi 0, %s72
    %s75 = sphi 0, %s74
    %s89 = sphi 0, %s75
    %s93 = sphi 0, %s93
    %s95 = sphi 0, %s93
    %s96 = sphi 0, %s95
    %s110 = sphi 0, %s96
    %s116 = sphi 0, %s118
    %s119 = sphi 0, %s116
    %s120 = sphi 0, %s119
    %s136 = sphi 0, %s120
    %s142 = sphi 0, %s144
    %s145 = sphi 0, %s142
    %s146 = sphi 0, %s145
    %s162 = sphi 0, %s146
  $region4: #{resblock_forward.4} parent=0 // loop_header_branch
    %15 = sbr.rel (%p13) target = $region8
  $region5: #{resblock_forward.4} parent=0 // loop_body
    %s17 = ssub.s32 %s12, 1
    %s18 = ssub.s32 %s12, 2
    %s19 = sadd.s32 %s12, 1
    %s20 = ssub.s32 %s12, %s19
    %p21 = scmp.eq.s32.totalorder %s20, 0
    %s23 = sadd.s32 %s22, 1
    %s24 = scalar_select %p21, %s22, %s23
    %p27 = pneg %p21
    %p28 = scmp.eq.s32.totalorder %s12, 1
    %p29 = por %p27, %p28
    %p30 = scmp.ne.s32.totalorder %s22, %s25
    %p31 = scmp.eq.s32.totalorder %s12, 0
    %p32 = por %p30, %p31
    %p33 = scmp.ne.s32.totalorder %s22, %s25
    %p34 = scmp.eq.s32.totalorder %s17, 1
    %p35 = por %p33, %p34
    %p36 = scmp.ne.s32.totalorder %s25, %s26
    %p37 = scmp.eq.s32.totalorder %s17, 0
    %p38 = por %p36, %p37
    %p39 = scmp.ne.s32.totalorder %s25, %s26
    %p40 = scmp.eq.s32.totalorder %s18, 1
    %p41 = por %p39, %p40
    %p43 = scmp.ne.s32.totalorder %s26, %s42
    %p44 = scmp.eq.s32.totalorder %s18, 0
    %p45 = por %p43, %p44
    %s46 = ssub.s32 %s12, %s19
    %p47 = scmp.eq.s32.totalorder %s46, 0
    %s49 = sadd.s32 %s48, 1
    %s50 = scalar_select %p47, %s48, %s49
    %p53 = pneg %p47
    %p54 = scmp.eq.s32.totalorder %s12, 1
    %p55 = por %p53, %p54
    %p56 = scmp.ne.s32.totalorder %s48, %s51
    %p57 = scmp.eq.s32.totalorder %s12, 0
    %p58 = por %p56, %p57
    %p59 = scmp.ne.s32.totalorder %s48, %s51
    %p60 = scmp.eq.s32.totalorder %s17, 1
    %p61 = por %p59, %p60
    %p62 = scmp.ne.s32.totalorder %s51, %s52
    %p63 = scmp.eq.s32.totalorder %s17, 0
    %p64 = por %p62, %p63
    %p65 = scmp.ne.s32.totalorder %s51, %s52
    %p66 = scmp.eq.s32.totalorder %s18, 1
    %p67 = por %p65, %p66
    %p69 = scmp.ne.s32.totalorder %s52, %s68
    %p70 = scmp.eq.s32.totalorder %s18, 0
    %p71 = por %p69, %p70
    %s73 = sadd.s32 %s72, 1
    %p76 = scmp.eq.s32.totalorder %s12, 1
    %p77 = scmp.ne.s32.totalorder %s72, %s74
    %p78 = scmp.eq.s32.totalorder %s12, 0
    %p79 = por %p77, %p78
    %p80 = scmp.ne.s32.totalorder %s72, %s74
    %p81 = scmp.eq.s32.totalorder %s17, 1
    %p82 = por %p80, %p81
    %p83 = scmp.ne.s32.totalorder %s74, %s75
    %p84 = scmp.eq.s32.totalorder %s17, 0
    %p85 = por %p83, %p84
    %p86 = scmp.ne.s32.totalorder %s74, %s75
    %p87 = scmp.eq.s32.totalorder %s18, 1
    %p88 = por %p86, %p87
    %p90 = scmp.ne.s32.totalorder %s75, %s89
    %p91 = scmp.eq.s32.totalorder %s18, 0
    %p92 = por %p90, %p91
    %s94 = sadd.s32 %s93, 1
    %p97 = scmp.eq.s32.totalorder %s12, 1
    %p98 = scmp.ne.s32.totalorder %s93, %s95
    %p99 = scmp.eq.s32.totalorder %s12, 0
    %p100 = por %p98, %p99
    %p101 = scmp.ne.s32.totalorder %s93, %s95
    %p102 = scmp.eq.s32.totalorder %s17, 1
    %p103 = por %p101, %p102
    %p104 = scmp.ne.s32.totalorder %s95, %s96
    %p105 = scmp.eq.s32.totalorder %s17, 0
    %p106 = por %p104, %p105
    %p107 = scmp.ne.s32.totalorder %s95, %s96
    %p108 = scmp.eq.s32.totalorder %s18, 1
    %p109 = por %p107, %p108
    %p111 = scmp.ne.s32.totalorder %s96, %s110
    %p112 = scmp.eq.s32.totalorder %s18, 0
    %p113 = por %p111, %p112
    %s114 = ssub.s32 %s12, %s19
    %p115 = scmp.eq.s32.totalorder %s114, 0
    %s117 = sadd.s32 %s116, 1
    %s118 = scalar_select %p115, %s116, %s117
    %p121 = pneg %p115
    %p122 = scmp.eq.s32.totalorder %s12, 1
    %p123 = por %p121, %p122
    %p124 = scmp.ne.s32.totalorder %s116, %s119
    %p125 = scmp.eq.s32.totalorder %s12, 0
    %p126 = por %p124, %p125
    %p127 = scmp.ne.s32.totalorder %s116, %s119
    %p128 = scmp.eq.s32.totalorder %s17, 1
    %p129 = por %p127, %p128
    %p130 = scmp.ne.s32.totalorder %s119, %s120
    %p131 = scmp.eq.s32.totalorder %s17, 0
    %p132 = por %p130, %p131
    %p133 = scmp.ne.s32.totalorder %s119, %s120
    %p134 = scmp.eq.s32.totalorder %s18, 1
    %p135 = por %p133, %p134
    %p137 = scmp.ne.s32.totalorder %s120, %s136
    %p138 = scmp.eq.s32.totalorder %s18, 0
    %p139 = por %p137, %p138
    %s140 = ssub.s32 %s12, %s19
    %p141 = scmp.eq.s32.totalorder %s140, 0
    %s143 = sadd.s32 %s142, 1
    %s144 = scalar_select %p141, %s142, %s143
    %p147 = pneg %p141
    %p148 = scmp.eq.s32.totalorder %s12, 1
    %p149 = por %p147, %p148
    %p150 = scmp.ne.s32.totalorder %s142, %s145
    %p151 = scmp.eq.s32.totalorder %s12, 0
    %p152 = por %p150, %p151
    %p153 = scmp.ne.s32.totalorder %s142, %s145
    %p154 = scmp.eq.s32.totalorder %s17, 1
    %p155 = por %p153, %p154
    %p156 = scmp.ne.s32.totalorder %s145, %s146
    %p157 = scmp.eq.s32.totalorder %s17, 0
    %p158 = por %p156, %p157
    %p159 = scmp.ne.s32.totalorder %s145, %s146
    %p160 = scmp.eq.s32.totalorder %s18, 1
    %p161 = por %p159, %p160
    %p163 = scmp.ne.s32.totalorder %s146, %s162
    %p164 = scmp.eq.s32.totalorder %s18, 0
    %p165 = por %p163, %p164
    %p166 = scmp.le.s32.totalorder 1, %s12
    %p167 = scmp.lt.s32.totalorder %s12, 3
    %p168 = pnand %p166, %p167
    %p169 = pneg %p168
    // Predicated region
    $region9: #{resblock_forward.4} parent=5 // pred_check
      _
    $region10: #{resblock_forward.4} parent=5 // pred_check_branch
      %171 = sbr.rel (%p168) target = $region12
    $region11: #{resblock_forward.4} parent=5 // pred_region
      %s172 = ssub.s32 %s12, 1
      // Predicated region
      $region13: #{resblock_forward.4} parent=11 // pred_check
        %p173 = pneg %p85
      $region14: #{resblock_forward.4} parent=11 // pred_check_branch
        %175 = sbr.rel (%p173) target = $region16
      $region15: #{resblock_forward.4} parent=11 // pred_region
        _
      $region16: #{resblock_forward.4} parent=11 // pred_fallthru
        _
      // Predicated region
      $region17: #{resblock_forward.4} parent=11 // pred_check
        %p176 = pneg %p106
      $region18: #{resblock_forward.4} parent=11 // pred_check_branch
        %178 = sbr.rel (%p176) target = $region20
      $region19: #{resblock_forward.4} parent=11 // pred_region
        _
      $region20: #{resblock_forward.4} parent=11 // pred_fallthru
        _
    $region12: #{resblock_forward.4} parent=5 // pred_fallthru
      _
    %p179 = scmp.lt.s32.totalorder %s12, 2
    // Predicated region
    $region21: #{resblock_forward.4} parent=5 // pred_check
      %p180 = pneg %p179
    $region22: #{resblock_forward.4} parent=5 // pred_check_branch
      %182 = sbr.rel (%p180) target = $region24
    $region23: #{resblock_forward.4} parent=5 // pred_region
      // Predicated region
      $region25: #{resblock_forward.4} parent=23 // pred_check
        %p183 = pneg %p32
      $region26: #{resblock_forward.4} parent=23 // pred_check_branch
        %185 = sbr.rel (%p183) target = $region28
      $region27: #{resblock_forward.4} parent=23 // pred_region
        %p186 = scmp.lt.s32.totalorder %s12, 1
        %s187 = scalar_select %p186, %s12, 1
        %s188 = smul.addr %s187, 8
        %s189 = scalar_lea.vmem %s0, %s188
      $region28: #{resblock_forward.4} parent=23 // pred_fallthru
        _
      // Predicated region
      $region29: #{resblock_forward.4} parent=23 // pred_check
        %p190 = pneg %p58
      $region30: #{resblock_forward.4} parent=23 // pred_check_branch
        %192 = sbr.rel (%p190) target = $region32
      $region31: #{resblock_forward.4} parent=23 // pred_region
        %p193 = scmp.lt.s32.totalorder %s12, 1
        %s194 = scalar_select %p193, %s12, 1
        %s195 = smul.addr %s194, 8
        %s196 = scalar_lea.vmem %s1, %s195
      $region32: #{resblock_forward.4} parent=23 // pred_fallthru
        _
    $region24: #{resblock_forward.4} parent=5 // pred_fallthru
      _
    %p197 = scmp.le.s32.totalorder 1, %s12
    %p198 = scmp.lt.s32.totalorder %s12, 3
    %p199 = pnand %p197, %p198
    %p200 = pneg %p199
    // Predicated region
    $region33: #{resblock_forward.4} parent=5 // pred_check
      _
    $region34: #{resblock_forward.4} parent=5 // pred_check_branch
      %202 = sbr.rel (%p199) target = $region36
    $region35: #{resblock_forward.4} parent=5 // pred_region
      %s203 = ssub.s32 %s12, 1
      %p204 = scmp.lt.s32.totalorder %s17, 1
      %s205 = scalar_select %p204, %s17, 1
      %s206 = smul.addr %s205, 8
      %s207 = scalar_lea.vmem %s0, %s206
      %p208 = pneg %p38
      %p209 = pneg %p35
      %p210 = scmp.lt.s32.totalorder %s17, 1
      %s211 = scalar_select %p210, %s17, 1
      %s212 = smul.addr %s211, 8
      %s213 = scalar_lea.vmem %s1, %s212
      %p214 = pneg %p64
      %p215 = pneg %p61
      %p216 = pneg %p85
      %p217 = pneg %p82
      %p218 = pneg %p106
      %p219 = pneg %p103
      %p220 = pneg %p132
      %p221 = pneg %p129
      %p222 = scmp.lt.s32.totalorder %s17, 1
      %s223 = scalar_select %p222, %s17, 1
      %s224 = smul.addr %s223, 8
      %s225 = scalar_lea.vmem %s4, %s224
      %p226 = pneg %p158
      %p227 = pneg %p155
      %p228 = scmp.lt.s32.totalorder %s17, 1
      %s229 = scalar_select %p228, %s17, 1
      %s230 = smul.addr %s229, 8
      %s231 = scalar_lea.vmem %s5, %s230
      %p232 = scmp.lt.s32.totalorder %s17, 1
      %s233 = scalar_select %p232, %s17, 1
      %s234 = smul.addr %s233, 8
      %s235 = scalar_lea.vmem %s0, %s234
      %p236 = scmp.lt.s32.totalorder %s17, 1
      %s237 = scalar_select %p236, %s17, 1
      %s238 = smul.addr %s237, 8
      %s239 = scalar_lea.vmem %s1, %s238
      %p240 = scmp.lt.s32.totalorder %s17, 1
      %s241 = scalar_select %p240, %s17, 1
      %s242 = smul.addr %s241, 8
      %s243 = scalar_lea.vmem %s4, %s242
      %p244 = scmp.lt.s32.totalorder %s17, 1
      %s245 = scalar_select %p244, %s17, 1
      %s246 = smul.addr %s245, 8
      %s247 = scalar_lea.vmem %s5, %s246
      %v249 = vld [vmem:[%s235] sm:$0xff]
      %v250 = vld [vmem:[%s2] sm:$0xff]
      %252 = vset.pattern.permute.xlu0 0
      %253 = vperm.xlu0 %252, %v250
      %v254 = vpop.permute.xlu0 %253
      %v256 = vmul.f32 %v249, %v254
      %257 = vset.pattern.permute.xlu0 1
      %258 = vperm.xlu0 %257, %v250
      %v259 = vpop.permute.xlu0 %258
      %v261 = vadd.f32 %v256, %v259
      %vm262 = vcmask 19456
      %263 = vst.msk [vmem:[#allocation2] sm:$0xf] %vm262, 0
      %v264 = vpack.c.bf16 %v261, %v261
      %v266 = vunpack.c.l.b16 %v264
      %v267 = vpack.c.b16 %v266, %v266
      %268 = vrot.lane.b32.xlu0 %v267, 3
      %v269 = vpop.permute.xlu0 %268
      %vm271 = vcmask 125976
      %272 = vst.msk [vmem:[#allocation2] sm:$0xf] %vm271, %v269
      %vm273 = vcmask 11264
      %274 = vst.msk [vmem:[#allocation2 + $0x4] sm:$0xf] %vm273, 0
      %275 = vrot.lane.b32.xlu0 %v267, 2
      %v276 = vpop.permute.xlu0 %275
      %vm278 = vcmask 125968
      %279 = vst.msk [vmem:[#allocation2 + $0x4] sm:$0xf] %vm278, %v276
      %vm280 = vcmask 3072
      %281 = vst.msk [vmem:[#allocation2 + $0x8] sm:$0xf] %vm280, 0
      %282 = vrot.lane.b32.xlu0 %v267, 1
      %v283 = vpop.permute.xlu0 %282
      %vm285 = vcmask 125960
      %286 = vst.msk [vmem:[#allocation2 + $0x8] sm:$0xf] %vm285, %v283
      %vm287 = vcmask 125952
      %288 = vst.msk [vmem:[#allocation2 + $0xc] sm:$0xf] %vm287, %v264
      %vm289 = vcmask 126072
      %290 = vst.msk [vmem:[#allocation2 + $0x10] sm:$0xf] %vm289, 0
      %291 = vrot.lane.b32.xlu0 %v267, 127
      %v292 = vpop.permute.xlu0 %291
      %vm294 = vcmask 117760
      %295 = vst.msk [vmem:[#allocation2 + $0x10] sm:$0xf] %vm294, %v292
      %vm296 = vcmask 126064
      %297 = vst.msk [vmem:[#allocation2 + $0x14] sm:$0xf] %vm296, 0
      %298 = vrot.lane.b32.xlu0 %v267, 126
      %v299 = vpop.permute.xlu0 %298
      %vm301 = vcmask 109568
      %302 = vst.msk [vmem:[#allocation2 + $0x14] sm:$0xf] %vm301, %v299
      %vm303 = vcmask 126056
      %304 = vst.msk [vmem:[#allocation2 + $0x18] sm:$0xf] %vm303, 0
      %305 = vrot.lane.b32.xlu0 %v267, 125
      %v306 = vpop.permute.xlu0 %305
      %vm308 = vcmask 101376
      %309 = vst.msk [vmem:[#allocation2 + $0x18] sm:$0xf] %vm308, %v306
      %v310 = vld [vmem:[%s3] sm:$0xf]
      %v311 = vld [vmem:[#allocation2] sm:$0xf]
      %v312 = vld [vmem:[#allocation2 + $0x4] sm:$0xf]
      %v313 = vld [vmem:[#allocation2 + $0x8] sm:$0xf]
      %v314 = vld [vmem:[#allocation2 + $0xc] sm:$0xf]
      %v315 = vld [vmem:[#allocation2 + $0x10] sm:$0xf]
      %v316 = vld [vmem:[#allocation2 + $0x14] sm:$0xf]
      %v317 = vld [vmem:[#allocation2 + $0x18] sm:$0xf]
      %v318 = vld [vmem:[%s239] sm:$0xff]
      %v326 = vunpack.c.l.b16 %v311
      %v327 = vunpack.c.l.b16 %v312
      %v328 = vunpack.c.l.b16 %v313
      %v329 = vunpack.c.l.b16 %v314
      %v330 = vunpack.c.l.b16 %v315
      %v331 = vunpack.c.l.b16 %v316
      %v332 = vunpack.c.l.b16 %v317
      %v333 = vpack.c.b16 %v327, %v326
      %v334 = vpack.c.b16 %v329, %v328
      %v335 = vpack.c.b16 %v331, %v330
      %v336 = vpack.c.b16 %v332, %v332
      %vm340 = vcmask 457728
      %v342 = vsel %vm340, %v310, 0
      %vm344 = vcmask 1043456
      %v346 = vsel %vm344, %v336, 0
      %348 = vmatprep.subr.bf16.mxu0 0
      %349 = vmatpush1.bf16.msra.mxu0 0
      %350 = vmatprep.subr.bf16.mxu0 0
      %351 = vmatpush1.bf16.msra.mxu0 0
      %352 = vmatprep.subr.bf16.mxu0 0
      %353 = vmatpush1.bf16.msra.mxu0 0
      %354 = vmatprep.subr.bf16.mxu0 0
      %355 = vmatpush1.bf16.msra.mxu0 0
      %356 = vmatprep.subr.bf16.mxu0 0
      %357 = vmatpush1.bf16.msra.mxu0 %v346
      %358 = vmatprep.subr.bf16.mxu0 0
      %359 = vmatpush1.bf16.msra.mxu0 %v335
      %360 = vmatprep.subr.bf16.mxu0 0
      %361 = vmatpush1.bf16.msra.mxu0 %v334
      %362 = vmatprep.subr.bf16.mxu0 0
      %363 = vmatpush1.bf16.msra.mxu0 %v333
      %364 = vmatprep.subr.bf16.mxu0 0
      %365 = vmatpush2.bf16.msra.mxu0 0
      %366 = vmatprep.subr.bf16.mxu0 0
      %367 = vmatpush2.bf16.msra.mxu0 0
      %368 = vmatprep.subr.bf16.mxu0 0
      %369 = vmatpush2.bf16.msra.mxu0 0
      %370 = vmatprep.subr.bf16.mxu0 0
      %371 = vmatpush2.bf16.msra.mxu0 0
      %372 = vmatprep.subr.bf16.mxu0 0
      %373 = vmatpush2.bf16.msra.mxu0 0
      %374 = vmatprep.subr.bf16.mxu0 0
      %375 = vmatpush2.bf16.msra.mxu0 0
      %376 = vmatprep.subr.bf16.mxu0 0
      %377 = vmatpush2.bf16.msra.mxu0 0
      %378 = vmatprep.subr.bf16.mxu0 0
      %379 = vmatpush2.bf16.msra.mxu0 0
      %380 = vmatprep.mubr.bf16.mxu0 0
      %381 = vmatmul.mubr.bf16.gmra.mxu0 %v342
      %v382 = vpop.f32.mrf.mxu0
      %v383 = vadd.f32 %v318, %v382
      %v384 = vpop.f32.mrf.mxu0
      %v385 = vpop.f32.mrf.mxu0
      %v386 = vpop.f32.mrf.mxu0
      %387 = vdwg.mxu0
      %v388 = vmax.f32 %v383, 0.0
      %vm389 = vcmask 130048
      %390 = vst.msk [vmem:[%s243] sm:$0xff] %vm389, %v388
      %v391 = vsel %vm389, %v388, 0.0
      %392 = vadd.xlane.f32.xlu0 %v391
      %v393 = vpop.xlane.xlu0 %392
      %v394 = vmul.f32 %v393, 0.0625
      %v395 = vsub.f32 %v388, %v394
      %vm396 = vcmask 7168
      %397 = vst.msk [vmem:[%s247] sm:$0xff] %vm396, %v393
      %v398 = vmul.f32 %v395, %v395
      %v399 = vsel %vm389, %v398, 0.0
      %400 = vadd.xlane.f32.xlu0 %v399
      %v401 = vpop.xlane.xlu0 %400
      %vm402 = vcmask 15368
      %403 = vst.msk [vmem:[%s247] sm:$0xff] %vm402, %v401
      %p404 = scmp.lt.s32.totalorder %s17, 1
      %s405 = scalar_select %p404, %s17, 1
      %s406 = smul.addr %s405, 8
      %s407 = scalar_lea.vmem %s4, %s406
      %p408 = scmp.lt.s32.totalorder %s17, 1
      %s409 = scalar_select %p408, %s17, 1
      %s410 = smul.addr %s409, 8
      %s411 = scalar_lea.vmem %s5, %s410
      // Predicated region
      $region37: #{resblock_forward.4} parent=35 // pred_check
        %p412 = pneg %p129
      $region38: #{resblock_forward.4} parent=35 // pred_check_branch
        %414 = sbr.rel (%p412) target = $region40
      $region39: #{resblock_forward.4} parent=35 // pred_region
        _
      $region40: #{resblock_forward.4} parent=35 // pred_fallthru
        _
      // Predicated region
      $region41: #{resblock_forward.4} parent=35 // pred_check
        %p415 = pneg %p155
      $region42: #{resblock_forward.4} parent=35 // pred_check_branch
        %417 = sbr.rel (%p415) target = $region44
      $region43: #{resblock_forward.4} parent=35 // pred_region
        _
      $region44: #{resblock_forward.4} parent=35 // pred_fallthru
        _
    $region36: #{resblock_forward.4} parent=5 // pred_fallthru
      _
    %p418 = scmp.le.s32.totalorder 2, %s12
    // Predicated region
    $region45: #{resblock_forward.4} parent=5 // pred_check
      %p419 = pneg %p418
    $region46: #{resblock_forward.4} parent=5 // pred_check_branch
      %421 = sbr.rel (%p419) target = $region48
    $region47: #{resblock_forward.4} parent=5 // pred_region
      %s422 = ssub.s32 %s12, 2
      // Predicated region
      $region49: #{resblock_forward.4} parent=47 // pred_check
        %p423 = pneg %p135
      $region50: #{resblock_forward.4} parent=47 // pred_check_branch
        %425 = sbr.rel (%p423) target = $region52
      $region51: #{resblock_forward.4} parent=47 // pred_region
        %p426 = scmp.lt.s32.totalorder %s18, 1
        %s427 = scalar_select %p426, %s18, 1
        %s428 = smul.addr %s427, 8
        %s429 = scalar_lea.vmem %s4, %s428
      $region52: #{resblock_forward.4} parent=47 // pred_fallthru
        _
      // Predicated region
      $region53: #{resblock_forward.4} parent=47 // pred_check
        %p430 = pneg %p161
      $region54: #{resblock_forward.4} parent=47 // pred_check_branch
        %432 = sbr.rel (%p430) target = $region56
      $region55: #{resblock_forward.4} parent=47 // pred_region
        %p433 = scmp.lt.s32.totalorder %s18, 1
        %s434 = scalar_select %p433, %s18, 1
        %s435 = smul.addr %s434, 8
        %s436 = scalar_lea.vmem %s5, %s435
      $region56: #{resblock_forward.4} parent=47 // pred_fallthru
        _
    $region48: #{resblock_forward.4} parent=5 // pred_fallthru
      _
  $region6: #{resblock_forward.4} parent=0 // loop_footer
    %s16 = sadd.s32 1, %s12
  $region7: #{resblock_forward.4} parent=0 // loop_footer_branch
    %11 = sbr.rel target = $region3
  $region8: #{resblock_forward.4} parent=0 // loop_exit
    _

</llo_original>
